<compile_context>
chip_gen: v6e
topology: v6e:2x2x1
jax: 0.10.0
libtpu: 0.0.40
codegen_flags: <defaults>
</compile_context>

<pallas_src>
import jax
import jax.numpy as jnp
from jax.experimental import pallas as pl
from jax.experimental.pallas import tpu as pltpu


def _round_up(x, m):
    return (x + m - 1) // m * m


def _leaky_relu(v, slope=0.01):
    return jnp.where(v > 0, v, slope * v)


def _make_gcae_kernel(layer_dims, d_pad, use_bf16):
    """Builds the fused 8-layer kernel.

    layer_dims : list of true (din, dout) per layer (static; decides matmul
                 order per layer).
    d_pad      : common padded feature width (multiple of 128).
    use_bf16   : cast MXU operands to bf16 (f32 accumulation) for large graphs.
    """
    cdtype = jnp.bfloat16 if use_bf16 else jnp.float32

    def kernel(x_ref, adj_ref, p_ref, lat_ref, out_ref):
        adj = adj_ref[...].astype(cdtype)

        def gcn(h, layer):
            din, dout = layer_dims[layer]
            # Static slices of the packed parameter slab (no extra DMAs).
            w = p_ref[layer, :d_pad, :].astype(cdtype)      # [d_pad, d_pad]
            b = p_ref[layer, d_pad:d_pad + 1, :]            # [1, d_pad]
            hc = h.astype(cdtype)
            if dout > din:
                # Aggregate on the narrower width first: (adj @ h) @ W
                agg = jnp.dot(adj, hc, preferred_element_type=jnp.float32)
                y = jnp.dot(agg.astype(cdtype), w,
                            preferred_element_type=jnp.float32)
            else:
                # Transform first: adj @ (h @ W)
                sup = jnp.dot(hc, w, preferred_element_type=jnp.float32)
                y = jnp.dot(adj, sup.astype(cdtype),
                            preferred_element_type=jnp.float32)
            return y + b

        h = x_ref[...]
        h = _leaky_relu(gcn(h, 0))
        h = _leaky_relu(gcn(h, 1))
        h = _leaky_relu(gcn(h, 2))
        lat = gcn(h, 3)
        lat_ref[...] = lat                       # lane-dense [n_pad, d_pad] store
        h = _leaky_relu(gcn(lat, 4))
        h = _leaky_relu(gcn(h, 5))
        h = _leaky_relu(gcn(h, 6))
        out_ref[...] = gcn(h, 7)                 # lane-dense [n_pad, d_pad] store

    return kernel


def gcae_forward(x, adj, inv_adj, params, use_bf16=False):
    """GCAE forward.

    x      : [N, n_feat] or [B, N, n_feat]
    adj    : [N, N]      or [B, N, N]
    params : list of 8 (W, b) tuples (encoder1..4, decoder1..4)
    Returns (lat, x_reconstructed) with the same leading layout as x.
    """
    del inv_adj  # unused in the reference forward pass

    batched = x.ndim == 3
    if not batched:
        x = x[None]
        adj = adj[None]
    B, N, n_feat = x.shape

    layer_dims = [(int(w.shape[0]), int(w.shape[1])) for w, _ in params]
    n_lat = layer_dims[3][1]
    d_max = max(max(d) for d in layer_dims)
    d_pad = _round_up(max(d_max, n_feat), 128)   # common lane-dense width
    n_pad = _round_up(N, 8)                      # sublane alignment

    # ---- pack all weights/biases into one zero-padded slab (single DMA) ----
    # slab[l, :din, :dout] = W_l ; slab[l, d_pad, :dout] = b_l ; rest zero.
    # (In production this slab would be built once, outside the step fn.)
    slab = jnp.zeros((len(params), d_pad + 8, d_pad), jnp.float32)
    for i, (w, b) in enumerate(params):
        din, dout = w.shape
        slab = slab.at[i, :din, :dout].set(w.astype(jnp.float32))
        slab = slab.at[i, d_pad, :dout].set(b.reshape(-1).astype(jnp.float32))

    # Zero-pad x / adj.  Padded feature columns and padded node rows/cols are
    # inert: zero adj columns mean padded nodes never feed real nodes, and
    # zero weight/bias padding keeps padded feature lanes at zero.
    x_pad = jnp.zeros((B, n_pad, d_pad), jnp.float32).at[:, :N, :n_feat].set(x)
    adj_pad = jnp.zeros((B, n_pad, n_pad), jnp.float32).at[:, :N, :N].set(adj)

    kernel = _make_gcae_kernel(layer_dims, d_pad, use_bf16)

    # Advisory cost estimate (padded shapes = what actually executes).
    flops = 0
    for _ in layer_dims:
        flops += 2 * n_pad * d_pad * d_pad          # feature transform
        flops += 2 * n_pad * n_pad * d_pad          # adjacency aggregation
    flops *= B
    bytes_accessed = 4 * (B * (n_pad * n_pad + 3 * n_pad * d_pad)
                          + int(slab.size))
    cost = pl.CostEstimate(flops=flops, transcendentals=0,
                           bytes_accessed=bytes_accessed)

    # TODO(synk): for N beyond a few thousand nodes, add a second grid axis
    # tiling node rows (adj blocked (tm, N)) so adj streams through VMEM
    # instead of being fully resident (mandatory on v7x's 64 MiB VMEM).
    lat_p, out_p = pl.pallas_call(
        kernel,
        out_shape=(
            jax.ShapeDtypeStruct((B, n_pad, d_pad), jnp.float32),
            jax.ShapeDtypeStruct((B, n_pad, d_pad), jnp.float32),
        ),
        grid=(B,),
        in_specs=[
            pl.BlockSpec((None, n_pad, d_pad), lambda b: (b, 0, 0)),   # x
            pl.BlockSpec((None, n_pad, n_pad), lambda b: (b, 0, 0)),   # adj
            pl.BlockSpec(tuple(slab.shape), lambda b: (0, 0, 0)),      # params
        ],
        out_specs=(
            pl.BlockSpec((None, n_pad, d_pad), lambda b: (b, 0, 0)),   # lat
            pl.BlockSpec((None, n_pad, d_pad), lambda b: (b, 0, 0)),   # recon
        ),
        compiler_params=pltpu.CompilerParams(
            dimension_semantics=("parallel",)),    # graphs shard across TCs (v7x)
        cost_estimate=cost,
    )(x_pad, adj_pad, slab)

    lat = lat_p[:, :N, :n_lat]
    out = out_p[:, :N, :n_feat]
    if not batched:
        lat, out = lat[0], out[0]
    return lat, out


def init_gcae_params(key, n_feat, n_lat):
    """Deterministic init matching GraphConvolution's uniform(-1/sqrt(out), 1/sqrt(out))."""
    n_hid1, n_hid2, n_hid3 = 64, 32, 16
    dims = [
        (n_feat, n_hid1), (n_hid1, n_hid2), (n_hid2, n_hid3), (n_hid3, n_lat),
        (n_lat, n_hid3), (n_hid3, n_hid2), (n_hid2, n_hid1), (n_hid1, n_feat),
    ]
    params = []
    for (din, dout) in dims:
        key, kw, kb = jax.random.split(key, 3)
        bound = 1.0 / jnp.sqrt(jnp.float32(dout))
        w = jax.random.uniform(kw, (din, dout), jnp.float32, -bound, bound)
        b = jax.random.uniform(kb, (1, dout), jnp.float32, -bound, bound)
        params.append((w, b))
    return params


def reference_forward(x, adj, params):
    """Pure-JAX reference of the same forward for a sanity check."""
    def gcn(h, w, b):
        return adj @ (h @ w) + b

    h = x
    h = jax.nn.leaky_relu(gcn(h, *params[0]), 0.01)
    h = jax.nn.leaky_relu(gcn(h, *params[1]), 0.01)
    h = jax.nn.leaky_relu(gcn(h, *params[2]), 0.01)
    lat = gcn(h, *params[3])
    h = jax.nn.leaky_relu(gcn(lat, *params[4]), 0.01)
    h = jax.nn.leaky_relu(gcn(h, *params[5]), 0.01)
    h = jax.nn.leaky_relu(gcn(h, *params[6]), 0.01)
    out = gcn(h, *params[7])
    return lat, out


if __name__ == "__main__":
    N = 16        # number of graph nodes
    n_feat = 32   # input feature dim
    n_lat = 8     # latent dim

    key = jax.random.PRNGKey(0)
    kx, kadj, kp = jax.random.split(key, 3)

    x = jax.random.normal(kx, (N, n_feat), jnp.float32)
    # symmetric, row-normalized-ish adjacency (dense)
    a = jax.random.uniform(kadj, (N, N), jnp.float32)
    adj = (a + a.T) * 0.5 + jnp.eye(N, dtype=jnp.float32)
    adj = adj / jnp.sum(adj, axis=1, keepdims=True)
    inv_adj = jnp.linalg.pinv(adj)  # unused by forward, kept for signature parity

    params = init_gcae_params(kp, n_feat, n_lat)

    # --- single graph (module-faithful call) ---
    lat, out = gcae_forward(x, adj, inv_adj, params)
    lat = jax.block_until_ready(lat)
    out = jax.block_until_ready(out)

    lat_ref, out_ref = reference_forward(x, adj, params)
    assert lat.shape == (N, n_lat) and out.shape == (N, n_feat)
    assert jnp.allclose(lat, lat_ref, atol=1e-4, rtol=1e-4)
    assert jnp.allclose(out, out_ref, atol=1e-4, rtol=1e-4)

    # --- batched graphs: grid over B, "parallel" axis (megacore on v7x) ---
    B = 2
    kxb, kab = jax.random.split(jax.random.PRNGKey(1))
    xb = jax.random.normal(kxb, (B, N, n_feat), jnp.float32)
    ab = jax.random.uniform(kab, (B, N, N), jnp.float32)
    adjb = (ab + jnp.swapaxes(ab, 1, 2)) * 0.5 + jnp.eye(N, dtype=jnp.float32)
    adjb = adjb / jnp.sum(adjb, axis=2, keepdims=True)

    latb, outb = gcae_forward(xb, adjb, None, params)
    latb = jax.block_until_ready(latb)
    outb = jax.block_until_ready(outb)
    assert latb.shape == (B, N, n_lat) and outb.shape == (B, N, n_feat)
    for i in range(B):
        lr, rr = reference_forward(xb[i], adjb[i], params)
        assert jnp.allclose(latb[i], lr, atol=1e-4, rtol=1e-4)
        assert jnp.allclose(outb[i], rr, atol=1e-4, rtol=1e-4)

    print("KERNEL_OK")
</pallas_src>

<mosaic_0001>
module attributes {stable_mosaic.version = 11 : i64} {
  func.func @kernel(%arg0: i32, %arg1: memref<1x16x128xf32, #tpu.memory_space<vmem>>, %arg2: memref<1x16x16xf32, #tpu.memory_space<vmem>>, %arg3: memref<8x136x128xf32, #tpu.memory_space<vmem>>, %arg4: memref<1x16x128xf32, #tpu.memory_space<vmem>>, %arg5: memref<1x16x128xf32, #tpu.memory_space<vmem>>) attributes {dimension_semantics = [#tpu.dimension_semantics<parallel>], iteration_bounds = array<i64: 1>, scalar_prefetch = 0 : i64, scratch_operands = 0 : i64, tpu.core_type = #tpu.core_type<tc>, window_params = [{transform_indices = @transform_0, window_bounds = array<i64: 1, 16, 128>}, {transform_indices = @transform_1, window_bounds = array<i64: 1, 16, 16>}, {pipeline_mode = #tpu.pipeline_mode<synchronous>, transform_indices = @transform_2, window_bounds = array<i64: 8, 136, 128>}, {transform_indices = @transform_3, window_bounds = array<i64: 1, 16, 128>}, {transform_indices = @transform_4, window_bounds = array<i64: 1, 16, 128>}]} {
    %c0 = arith.constant 0 : index
    %c0_0 = arith.constant 0 : index
    %c0_1 = arith.constant 0 : index
    %0 = vector.load %arg2[%c0, %c0_0, %c0_1] : memref<1x16x16xf32, #tpu.memory_space<vmem>>, vector<1x16x16xf32>
    %1 = vector.shape_cast %0 : vector<1x16x16xf32> to vector<16x16xf32>
    %c0_2 = arith.constant 0 : index
    %c0_3 = arith.constant 0 : index
    %c0_4 = arith.constant 0 : index
    %2 = vector.load %arg1[%c0_2, %c0_3, %c0_4] : memref<1x16x128xf32, #tpu.memory_space<vmem>>, vector<1x16x128xf32>
    %3 = vector.shape_cast %2 : vector<1x16x128xf32> to vector<16x128xf32>
    %c0_5 = arith.constant 0 : index
    %c0_6 = arith.constant 0 : index
    %c0_7 = arith.constant 0 : index
    %4 = vector.load %arg3[%c0_5, %c0_6, %c0_7] : memref<8x136x128xf32, #tpu.memory_space<vmem>>, vector<1x128x128xf32>
    %5 = vector.shape_cast %4 : vector<1x128x128xf32> to vector<128x128xf32>
    %c0_8 = arith.constant 0 : index
    %c128 = arith.constant 128 : index
    %c0_9 = arith.constant 0 : index
    %6 = vector.load %arg3[%c0_8, %c128, %c0_9] : memref<8x136x128xf32, #tpu.memory_space<vmem>>, vector<1x1x128xf32>
    %7 = vector.shape_cast %6 : vector<1x1x128xf32> to vector<1x128xf32>
    %cst = arith.constant dense<0.000000e+00> : vector<16x128xf32>
    %8 = tpu.matmul %1, %3, %cst {dimension_numbers = #tpu.dot_dimension_numbers<[1], [0], [0], [1], [0, 0, 1, 1], [], []>} : vector<16x16xf32>, vector<16x128xf32>, vector<16x128xf32> -> vector<16x128xf32>
    %cst_10 = arith.constant dense<0.000000e+00> : vector<16x128xf32>
    %9 = tpu.matmul %8, %5, %cst_10 {dimension_numbers = #tpu.dot_dimension_numbers<[1], [0], [0], [1], [0, 0, 1, 1], [], []>} : vector<16x128xf32>, vector<128x128xf32>, vector<16x128xf32> -> vector<16x128xf32>
    %10 = vector.broadcast %7 : vector<1x128xf32> to vector<16x128xf32>
    %11 = arith.addf %9, %10 : vector<16x128xf32>
    %cst_11 = arith.constant 0.000000e+00 : f32
    %12 = vector.broadcast %cst_11 : f32 to vector<16x128xf32>
    %13 = arith.cmpf ogt, %11, %12 : vector<16x128xf32>
    %cst_12 = arith.constant 0.00999999977 : f32
    %14 = vector.broadcast %cst_12 : f32 to vector<16x128xf32>
    %15 = arith.mulf %14, %11 : vector<16x128xf32>
    %16 = arith.select %13, %11, %15 : vector<16x128xi1>, vector<16x128xf32>
    %c1 = arith.constant 1 : index
    %c0_13 = arith.constant 0 : index
    %c0_14 = arith.constant 0 : index
    %17 = vector.load %arg3[%c1, %c0_13, %c0_14] : memref<8x136x128xf32, #tpu.memory_space<vmem>>, vector<1x128x128xf32>
    %18 = vector.shape_cast %17 : vector<1x128x128xf32> to vector<128x128xf32>
    %c1_15 = arith.constant 1 : index
    %c128_16 = arith.constant 128 : index
    %c0_17 = arith.constant 0 : index
    %19 = vector.load %arg3[%c1_15, %c128_16, %c0_17] : memref<8x136x128xf32, #tpu.memory_space<vmem>>, vector<1x1x128xf32>
    %20 = vector.shape_cast %19 : vector<1x1x128xf32> to vector<1x128xf32>
    %cst_18 = arith.constant dense<0.000000e+00> : vector<16x128xf32>
    %21 = tpu.matmul %16, %18, %cst_18 {dimension_numbers = #tpu.dot_dimension_numbers<[1], [0], [0], [1], [0, 0, 1, 1], [], []>} : vector<16x128xf32>, vector<128x128xf32>, vector<16x128xf32> -> vector<16x128xf32>
    %cst_19 = arith.constant dense<0.000000e+00> : vector<16x128xf32>
    %22 = tpu.matmul %1, %21, %cst_19 {dimension_numbers = #tpu.dot_dimension_numbers<[1], [0], [0], [1], [0, 0, 1, 1], [], []>} : vector<16x16xf32>, vector<16x128xf32>, vector<16x128xf32> -> vector<16x128xf32>
    %23 = vector.broadcast %20 : vector<1x128xf32> to vector<16x128xf32>
    %24 = arith.addf %22, %23 : vector<16x128xf32>
    %cst_20 = arith.constant 0.000000e+00 : f32
    %25 = vector.broadcast %cst_20 : f32 to vector<16x128xf32>
    %26 = arith.cmpf ogt, %24, %25 : vector<16x128xf32>
    %cst_21 = arith.constant 0.00999999977 : f32
    %27 = vector.broadcast %cst_21 : f32 to vector<16x128xf32>
    %28 = arith.mulf %27, %24 : vector<16x128xf32>
    %29 = arith.select %26, %24, %28 : vector<16x128xi1>, vector<16x128xf32>
    %c2 = arith.constant 2 : index
    %c0_22 = arith.constant 0 : index
    %c0_23 = arith.constant 0 : index
    %30 = vector.load %arg3[%c2, %c0_22, %c0_23] : memref<8x136x128xf32, #tpu.memory_space<vmem>>, vector<1x128x128xf32>
    %31 = vector.shape_cast %30 : vector<1x128x128xf32> to vector<128x128xf32>
    %c2_24 = arith.constant 2 : index
    %c128_25 = arith.constant 128 : index
    %c0_26 = arith.constant 0 : index
    %32 = vector.load %arg3[%c2_24, %c128_25, %c0_26] : memref<8x136x128xf32, #tpu.memory_space<vmem>>, vector<1x1x128xf32>
    %33 = vector.shape_cast %32 : vector<1x1x128xf32> to vector<1x128xf32>
    %cst_27 = arith.constant dense<0.000000e+00> : vector<16x128xf32>
    %34 = tpu.matmul %29, %31, %cst_27 {dimension_numbers = #tpu.dot_dimension_numbers<[1], [0], [0], [1], [0, 0, 1, 1], [], []>} : vector<16x128xf32>, vector<128x128xf32>, vector<16x128xf32> -> vector<16x128xf32>
    %cst_28 = arith.constant dense<0.000000e+00> : vector<16x128xf32>
    %35 = tpu.matmul %1, %34, %cst_28 {dimension_numbers = #tpu.dot_dimension_numbers<[1], [0], [0], [1], [0, 0, 1, 1], [], []>} : vector<16x16xf32>, vector<16x128xf32>, vector<16x128xf32> -> vector<16x128xf32>
    %36 = vector.broadcast %33 : vector<1x128xf32> to vector<16x128xf32>
    %37 = arith.addf %35, %36 : vector<16x128xf32>
    %cst_29 = arith.constant 0.000000e+00 : f32
    %38 = vector.broadcast %cst_29 : f32 to vector<16x128xf32>
    %39 = arith.cmpf ogt, %37, %38 : vector<16x128xf32>
    %cst_30 = arith.constant 0.00999999977 : f32
    %40 = vector.broadcast %cst_30 : f32 to vector<16x128xf32>
    %41 = arith.mulf %40, %37 : vector<16x128xf32>
    %42 = arith.select %39, %37, %41 : vector<16x128xi1>, vector<16x128xf32>
    %c3 = arith.constant 3 : index
    %c0_31 = arith.constant 0 : index
    %c0_32 = arith.constant 0 : index
    %43 = vector.load %arg3[%c3, %c0_31, %c0_32] : memref<8x136x128xf32, #tpu.memory_space<vmem>>, vector<1x128x128xf32>
    %44 = vector.shape_cast %43 : vector<1x128x128xf32> to vector<128x128xf32>
    %c3_33 = arith.constant 3 : index
    %c128_34 = arith.constant 128 : index
    %c0_35 = arith.constant 0 : index
    %45 = vector.load %arg3[%c3_33, %c128_34, %c0_35] : memref<8x136x128xf32, #tpu.memory_space<vmem>>, vector<1x1x128xf32>
    %46 = vector.shape_cast %45 : vector<1x1x128xf32> to vector<1x128xf32>
    %cst_36 = arith.constant dense<0.000000e+00> : vector<16x128xf32>
    %47 = tpu.matmul %42, %44, %cst_36 {dimension_numbers = #tpu.dot_dimension_numbers<[1], [0], [0], [1], [0, 0, 1, 1], [], []>} : vector<16x128xf32>, vector<128x128xf32>, vector<16x128xf32> -> vector<16x128xf32>
    %cst_37 = arith.constant dense<0.000000e+00> : vector<16x128xf32>
    %48 = tpu.matmul %1, %47, %cst_37 {dimension_numbers = #tpu.dot_dimension_numbers<[1], [0], [0], [1], [0, 0, 1, 1], [], []>} : vector<16x16xf32>, vector<16x128xf32>, vector<16x128xf32> -> vector<16x128xf32>
    %49 = vector.broadcast %46 : vector<1x128xf32> to vector<16x128xf32>
    %50 = arith.addf %48, %49 : vector<16x128xf32>
    %c0_38 = arith.constant 0 : index
    %c0_39 = arith.constant 0 : index
    %c0_40 = arith.constant 0 : index
    %51 = vector.load %arg4[%c0_38, %c0_39, %c0_40] : memref<1x16x128xf32, #tpu.memory_space<vmem>>, vector<1x16x128xf32>
    %52 = vector.shape_cast %51 : vector<1x16x128xf32> to vector<16x128xf32>
    %53 = vector.shape_cast %50 : vector<16x128xf32> to vector<1x16x128xf32>
    tpu.vector_store %arg4[%c0_38, %c0_39, %c0_40], %53 {strides = array<i32>} : memref<1x16x128xf32, #tpu.memory_space<vmem>>, vector<1x16x128xf32>,
    %c4 = arith.constant 4 : index
    %c0_41 = arith.constant 0 : index
    %c0_42 = arith.constant 0 : index
    %54 = vector.load %arg3[%c4, %c0_41, %c0_42] : memref<8x136x128xf32, #tpu.memory_space<vmem>>, vector<1x128x128xf32>
    %55 = vector.shape_cast %54 : vector<1x128x128xf32> to vector<128x128xf32>
    %c4_43 = arith.constant 4 : index
    %c128_44 = arith.constant 128 : index
    %c0_45 = arith.constant 0 : index
    %56 = vector.load %arg3[%c4_43, %c128_44, %c0_45] : memref<8x136x128xf32, #tpu.memory_space<vmem>>, vector<1x1x128xf32>
    %57 = vector.shape_cast %56 : vector<1x1x128xf32> to vector<1x128xf32>
    %cst_46 = arith.constant dense<0.000000e+00> : vector<16x128xf32>
    %58 = tpu.matmul %1, %50, %cst_46 {dimension_numbers = #tpu.dot_dimension_numbers<[1], [0], [0], [1], [0, 0, 1, 1], [], []>} : vector<16x16xf32>, vector<16x128xf32>, vector<16x128xf32> -> vector<16x128xf32>
    %cst_47 = arith.constant dense<0.000000e+00> : vector<16x128xf32>
    %59 = tpu.matmul %58, %55, %cst_47 {dimension_numbers = #tpu.dot_dimension_numbers<[1], [0], [0], [1], [0, 0, 1, 1], [], []>} : vector<16x128xf32>, vector<128x128xf32>, vector<16x128xf32> -> vector<16x128xf32>
    %60 = vector.broadcast %57 : vector<1x128xf32> to vector<16x128xf32>
    %61 = arith.addf %59, %60 : vector<16x128xf32>
    %cst_48 = arith.constant 0.000000e+00 : f32
    %62 = vector.broadcast %cst_48 : f32 to vector<16x128xf32>
    %63 = arith.cmpf ogt, %61, %62 : vector<16x128xf32>
    %cst_49 = arith.constant 0.00999999977 : f32
    %64 = vector.broadcast %cst_49 : f32 to vector<16x128xf32>
    %65 = arith.mulf %64, %61 : vector<16x128xf32>
    %66 = arith.select %63, %61, %65 : vector<16x128xi1>, vector<16x128xf32>
    %c5 = arith.constant 5 : index
    %c0_50 = arith.constant 0 : index
    %c0_51 = arith.constant 0 : index
    %67 = vector.load %arg3[%c5, %c0_50, %c0_51] : memref<8x136x128xf32, #tpu.memory_space<vmem>>, vector<1x128x128xf32>
    %68 = vector.shape_cast %67 : vector<1x128x128xf32> to vector<128x128xf32>
    %c5_52 = arith.constant 5 : index
    %c128_53 = arith.constant 128 : index
    %c0_54 = arith.constant 0 : index
    %69 = vector.load %arg3[%c5_52, %c128_53, %c0_54] : memref<8x136x128xf32, #tpu.memory_space<vmem>>, vector<1x1x128xf32>
    %70 = vector.shape_cast %69 : vector<1x1x128xf32> to vector<1x128xf32>
    %cst_55 = arith.constant dense<0.000000e+00> : vector<16x128xf32>
    %71 = tpu.matmul %1, %66, %cst_55 {dimension_numbers = #tpu.dot_dimension_numbers<[1], [0], [0], [1], [0, 0, 1, 1], [], []>} : vector<16x16xf32>, vector<16x128xf32>, vector<16x128xf32> -> vector<16x128xf32>
    %cst_56 = arith.constant dense<0.000000e+00> : vector<16x128xf32>
    %72 = tpu.matmul %71, %68, %cst_56 {dimension_numbers = #tpu.dot_dimension_numbers<[1], [0], [0], [1], [0, 0, 1, 1], [], []>} : vector<16x128xf32>, vector<128x128xf32>, vector<16x128xf32> -> vector<16x128xf32>
    %73 = vector.broadcast %70 : vector<1x128xf32> to vector<16x128xf32>
    %74 = arith.addf %72, %73 : vector<16x128xf32>
    %cst_57 = arith.constant 0.000000e+00 : f32
    %75 = vector.broadcast %cst_57 : f32 to vector<16x128xf32>
    %76 = arith.cmpf ogt, %74, %75 : vector<16x128xf32>
    %cst_58 = arith.constant 0.00999999977 : f32
    %77 = vector.broadcast %cst_58 : f32 to vector<16x128xf32>
    %78 = arith.mulf %77, %74 : vector<16x128xf32>
    %79 = arith.select %76, %74, %78 : vector<16x128xi1>, vector<16x128xf32>
    %c6 = arith.constant 6 : index
    %c0_59 = arith.constant 0 : index
    %c0_60 = arith.constant 0 : index
    %80 = vector.load %arg3[%c6, %c0_59, %c0_60] : memref<8x136x128xf32, #tpu.memory_space<vmem>>, vector<1x128x128xf32>
    %81 = vector.shape_cast %80 : vector<1x128x128xf32> to vector<128x128xf32>
    %c6_61 = arith.constant 6 : index
    %c128_62 = arith.constant 128 : index
    %c0_63 = arith.constant 0 : index
    %82 = vector.load %arg3[%c6_61, %c128_62, %c0_63] : memref<8x136x128xf32, #tpu.memory_space<vmem>>, vector<1x1x128xf32>
    %83 = vector.shape_cast %82 : vector<1x1x128xf32> to vector<1x128xf32>
    %cst_64 = arith.constant dense<0.000000e+00> : vector<16x128xf32>
    %84 = tpu.matmul %1, %79, %cst_64 {dimension_numbers = #tpu.dot_dimension_numbers<[1], [0], [0], [1], [0, 0, 1, 1], [], []>} : vector<16x16xf32>, vector<16x128xf32>, vector<16x128xf32> -> vector<16x128xf32>
    %cst_65 = arith.constant dense<0.000000e+00> : vector<16x128xf32>
    %85 = tpu.matmul %84, %81, %cst_65 {dimension_numbers = #tpu.dot_dimension_numbers<[1], [0], [0], [1], [0, 0, 1, 1], [], []>} : vector<16x128xf32>, vector<128x128xf32>, vector<16x128xf32> -> vector<16x128xf32>
    %86 = vector.broadcast %83 : vector<1x128xf32> to vector<16x128xf32>
    %87 = arith.addf %85, %86 : vector<16x128xf32>
    %cst_66 = arith.constant 0.000000e+00 : f32
    %88 = vector.broadcast %cst_66 : f32 to vector<16x128xf32>
    %89 = arith.cmpf ogt, %87, %88 : vector<16x128xf32>
    %cst_67 = arith.constant 0.00999999977 : f32
    %90 = vector.broadcast %cst_67 : f32 to vector<16x128xf32>
    %91 = arith.mulf %90, %87 : vector<16x128xf32>
    %92 = arith.select %89, %87, %91 : vector<16x128xi1>, vector<16x128xf32>
    %c7 = arith.constant 7 : index
    %c0_68 = arith.constant 0 : index
    %c0_69 = arith.constant 0 : index
    %93 = vector.load %arg3[%c7, %c0_68, %c0_69] : memref<8x136x128xf32, #tpu.memory_space<vmem>>, vector<1x128x128xf32>
    %94 = vector.shape_cast %93 : vector<1x128x128xf32> to vector<128x128xf32>
    %c7_70 = arith.constant 7 : index
    %c128_71 = arith.constant 128 : index
    %c0_72 = arith.constant 0 : index
    %95 = vector.load %arg3[%c7_70, %c128_71, %c0_72] : memref<8x136x128xf32, #tpu.memory_space<vmem>>, vector<1x1x128xf32>
    %96 = vector.shape_cast %95 : vector<1x1x128xf32> to vector<1x128xf32>
    %cst_73 = arith.constant dense<0.000000e+00> : vector<16x128xf32>
    %97 = tpu.matmul %92, %94, %cst_73 {dimension_numbers = #tpu.dot_dimension_numbers<[1], [0], [0], [1], [0, 0, 1, 1], [], []>} : vector<16x128xf32>, vector<128x128xf32>, vector<16x128xf32> -> vector<16x128xf32>
    %cst_74 = arith.constant dense<0.000000e+00> : vector<16x128xf32>
    %98 = tpu.matmul %1, %97, %cst_74 {dimension_numbers = #tpu.dot_dimension_numbers<[1], [0], [0], [1], [0, 0, 1, 1], [], []>} : vector<16x16xf32>, vector<16x128xf32>, vector<16x128xf32> -> vector<16x128xf32>
    %99 = vector.broadcast %96 : vector<1x128xf32> to vector<16x128xf32>
    %100 = arith.addf %98, %99 : vector<16x128xf32>
    %c0_75 = arith.constant 0 : index
    %c0_76 = arith.constant 0 : index
    %c0_77 = arith.constant 0 : index
    %101 = vector.load %arg5[%c0_75, %c0_76, %c0_77] : memref<1x16x128xf32, #tpu.memory_space<vmem>>, vector<1x16x128xf32>
    %102 = vector.shape_cast %101 : vector<1x16x128xf32> to vector<16x128xf32>
    %103 = vector.shape_cast %100 : vector<16x128xf32> to vector<1x16x128xf32>
    tpu.vector_store %arg5[%c0_75, %c0_76, %c0_77], %103 {strides = array<i32>} : memref<1x16x128xf32, #tpu.memory_space<vmem>>, vector<1x16x128xf32>,
    return
  }
  func.func @transform_0(%arg0: i32) -> (i32, i32, i32) {
    %c0_i32 = arith.constant 0 : i32
    %c0_i32_0 = arith.constant 0 : i32
    %c0_i32_1 = arith.constant 0 : i32
    return %arg0, %c0_i32, %c0_i32_0 : i32, i32, i32
  }
  func.func @transform_1(%arg0: i32) -> (i32, i32, i32) {
    %c0_i32 = arith.constant 0 : i32
    %c0_i32_0 = arith.constant 0 : i32
    %c0_i32_1 = arith.constant 0 : i32
    return %arg0, %c0_i32, %c0_i32_0 : i32, i32, i32
  }
  func.func @transform_2(%arg0: i32) -> (i32, i32, i32) {
    %c0_i32 = arith.constant 0 : i32
    %c0_i32_0 = arith.constant 0 : i32
    %c0_i32_1 = arith.constant 0 : i32
    %c0_i32_2 = arith.constant 0 : i32
    return %c0_i32, %c0_i32_0, %c0_i32_1 : i32, i32, i32
  }
  func.func @transform_3(%arg0: i32) -> (i32, i32, i32) {
    %c0_i32 = arith.constant 0 : i32
    %c0_i32_0 = arith.constant 0 : i32
    %c0_i32_1 = arith.constant 0 : i32
    return %arg0, %c0_i32, %c0_i32_0 : i32, i32, i32
  }
  func.func @transform_4(%arg0: i32) -> (i32, i32, i32) {
    %c0_i32 = arith.constant 0 : i32
    %c0_i32_0 = arith.constant 0 : i32
    %c0_i32_1 = arith.constant 0 : i32
    return %arg0, %c0_i32, %c0_i32_0 : i32, i32, i32
  }
}

</mosaic_0001>

<llo_original>
// kernel: tpu_custom_call.1
$region0: #{tpu_custom_call.1}
  #allocation0 [shape = 'u32[]', space=smem, size = 0x4, offset = 0x4, fixed_abs, tag = 'smem constant byte address 0x4 - core index']
  #allocation1 [shape = 'u32[144,128]{1,0:T(1,128)}', space=vmem, size = 0x12000, scoped, tag = 'internal scratch']
  %s0 = inlined_call_operand.hbm [shape: f32[1,16,128], index: 0, kind: input, shape index: {}]
  %s1 = inlined_call_operand.hbm [shape: f32[1,16,16], index: 1, kind: input, shape index: {}]
  %s2 = inlined_call_operand.hbm [shape: f32[8,136,128], index: 2, kind: input, shape index: {}]
  %s3 = inlined_call_operand.hbm [shape: f32[1,16,128], index: 3, kind: output, shape index: {0}]
  %s4 = inlined_call_operand.hbm [shape: f32[1,16,128], index: 4, kind: output, shape index: {1}]
  %5 = xla_tuple %s3, %s4
  %s6 = sld [smem:[#allocation0]]
  $region42: #{tpu_custom_call.1} parent=0
    _
  %s8 = ssub.s32 1, %s6
  %s9 = scalar_select 0, %s8, %s6
  $region1: #{tpu_custom_call.1} parent=0
    #allocation2 [shape = 'u8[8192]{0}', space=vmem, size = 0x2000, scoped, tag = 'input window, operand 0, single buffered']
    #allocation3 [shape = 's32[1]{0}', space=sflag, size = 0x4, scoped, tag = 'scoped memory for tpu_custom_call.1']
    #allocation4 [shape = 's32[1]{0}', space=sflag, size = 0x4, scoped, tag = 'scoped memory for tpu_custom_call.1']
    #allocation5 [shape = 'u8[8192]{0}', space=vmem, size = 0x2000, scoped, tag = 'input window, operand 1, single buffered']
    #allocation6 [shape = 's32[1]{0}', space=sflag, size = 0x4, scoped, tag = 'scoped memory for tpu_custom_call.1']
    #allocation7 [shape = 'u8[557056]{0}', space=vmem, size = 0x88000, scoped, tag = 'input window, operand 2, single buffered']
    #allocation8 [shape = 'u8[8192]{0}', space=vmem, size = 0x2000, scoped, tag = 'output window, operand 0, single buffered']
    #allocation9 [shape = 'u8[8192]{0}', space=vmem, size = 0x2000, scoped, tag = 'output window, operand 1, single buffered']
    #allocation10 [shape = 's32[1]{0}', space=sflag, size = 0x4, scoped, tag = 'scoped memory for tpu_custom_call.1']
    %10 = vsyncpa [#allocation3], 0
    %11 = vsyncpa [#allocation6], 0
    %12 = vsyncpa [#allocation4], 0
    %13 = vsyncpa [#allocation10], 0
    // Predicated region
    $region2: #{tpu_custom_call.1} parent=1 // pred_check
      _
    $region3: #{tpu_custom_call.1} parent=1 // pred_check_branch
      %15 = sbr.rel (0) target = $region5
    $region4: #{tpu_custom_call.1} parent=1 // pred_region
      %s17 = ssub.s32 256, 256
      %18 = vsyncadd [#allocation3], %s17
      %s19 = sshll.u32 [#allocation2], 4
      %s20 = int_to_ptr.vmem [resolvable:$true] %s19
      %25 = dma.hbm_to_vmem [thread:$0]  %s0, 256, %s20, [#allocation3], 128, 128, 8
    $region5: #{tpu_custom_call.1} parent=1 // pred_fallthru
      _
    // Predicated region
    $region6: #{tpu_custom_call.1} parent=1 // pred_check
      _
    $region7: #{tpu_custom_call.1} parent=1 // pred_check_branch
      %27 = sbr.rel (0) target = $region9
    $region8: #{tpu_custom_call.1} parent=1 // pred_region
      %s29 = ssub.s32 256, 256
      %30 = vsyncadd [#allocation6], %s29
      %s31 = sshll.u32 [#allocation5], 4
      %s32 = int_to_ptr.vmem [resolvable:$true] %s31
      %37 = dma.hbm_to_vmem [thread:$0]  %s1, 256, %s32, [#allocation6], 128, 128, 8
    $region9: #{tpu_custom_call.1} parent=1 // pred_fallthru
      _
    // Predicated region
    $region10: #{tpu_custom_call.1} parent=1 // pred_check
      _
    $region11: #{tpu_custom_call.1} parent=1 // pred_check_branch
      %39 = sbr.rel (0) target = $region13
    $region12: #{tpu_custom_call.1} parent=1 // pred_region
      %s41 = ssub.s32 17408, 17408
      %42 = vsyncadd [#allocation6], %s41
      %s43 = sshll.u32 [#allocation7], 4
      %s44 = int_to_ptr.vmem [resolvable:$true] %s43
      %49 = dma.hbm_to_vmem [thread:$0]  %s2, 17408, %s44, [#allocation6], 128, 128, 8
    $region13: #{tpu_custom_call.1} parent=1 // pred_fallthru
      _
    // Predicated region
    $region14: #{tpu_custom_call.1} parent=1 // pred_check
      _
    $region15: #{tpu_custom_call.1} parent=1 // pred_check_branch
      %51 = sbr.rel (0) target = $region17
    $region16: #{tpu_custom_call.1} parent=1 // pred_region
      %52 = dma.done [#allocation3], 256
    $region17: #{tpu_custom_call.1} parent=1 // pred_fallthru
      _
    // Predicated region
    $region18: #{tpu_custom_call.1} parent=1 // pred_check
      _
    $region19: #{tpu_custom_call.1} parent=1 // pred_check_branch
      %54 = sbr.rel (0) target = $region21
    $region20: #{tpu_custom_call.1} parent=1 // pred_region
      %55 = dma.done [#allocation6], 256
    $region21: #{tpu_custom_call.1} parent=1 // pred_fallthru
      _
    // Predicated region
    $region22: #{tpu_custom_call.1} parent=1 // pred_check
      _
    $region23: #{tpu_custom_call.1} parent=1 // pred_check_branch
      %57 = sbr.rel (0) target = $region25
    $region24: #{tpu_custom_call.1} parent=1 // pred_region
      %58 = dma.done [#allocation6], 17408
    $region25: #{tpu_custom_call.1} parent=1 // pred_fallthru
      _
    %v59 = vld [vmem:[#allocation5] sm:$0xff]
    %v60 = vld [vmem:[#allocation5 + $0x8] sm:$0xff]
    %v61 = vld [vmem:[#allocation2] sm:$0xff]
    %v62 = vld [vmem:[#allocation2 + $0x8] sm:$0xff]
    %v63 = vld [vmem:[#allocation7] sm:$0xff]
    %v64 = vld [vmem:[#allocation7 + $0x8] sm:$0xff]
    %v65 = vld [vmem:[#allocation7 + $0x10] sm:$0xff]
    %v66 = vld [vmem:[#allocation7 + $0x18] sm:$0xff]
    %v67 = vld [vmem:[#allocation7 + $0x20] sm:$0xff]
    %v68 = vld [vmem:[#allocation7 + $0x28] sm:$0xff]
    %v69 = vld [vmem:[#allocation7 + $0x30] sm:$0xff]
    %v70 = vld [vmem:[#allocation7 + $0x38] sm:$0xff]
    %v71 = vld [vmem:[#allocation7 + $0x40] sm:$0xff]
    %v72 = vld [vmem:[#allocation7 + $0x48] sm:$0xff]
    %v73 = vld [vmem:[#allocation7 + $0x50] sm:$0xff]
    %v74 = vld [vmem:[#allocation7 + $0x58] sm:$0xff]
    %v75 = vld [vmem:[#allocation7 + $0x60] sm:$0xff]
    %v76 = vld [vmem:[#allocation7 + $0x68] sm:$0xff]
    %v77 = vld [vmem:[#allocation7 + $0x70] sm:$0xff]
    %v78 = vld [vmem:[#allocation7 + $0x78] sm:$0xff]
    %v79 = vld [vmem:[#allocation7 + $0x80] sm:$0x1]
    %vm80 = vcmask 130048
    %v82 = vsel %vm80, %v59, 0
    %v85 = vsel %vm80, %v60, 0
    %87 = vmatprep.subr.mxu0 0.0
    %88 = vmatpush1.msra.mxu0 0.0
    %89 = vmatprep.subr.mxu0 0.0
    %90 = vmatpush1.msra.mxu0 0.0
    %91 = vmatprep.subr.mxu0 0.0
    %92 = vmatpush1.msra.mxu0 0.0
    %93 = vmatprep.subr.mxu0 0.0
    %94 = vmatpush1.msra.mxu0 0.0
    %95 = vmatprep.subr.mxu0 0.0
    %96 = vmatpush1.msra.mxu0 0.0
    %97 = vmatprep.subr.mxu0 0.0
    %98 = vmatpush1.msra.mxu0 0.0
    %99 = vmatprep.subr.mxu0 0.0
    %100 = vmatpush1.msra.mxu0 0.0
    %101 = vmatprep.subr.mxu0 0.0
    %102 = vmatpush1.msra.mxu0 0.0
    %103 = vmatprep.subr.mxu0 0.0
    %104 = vmatpush1.msra.mxu0 0.0
    %105 = vmatprep.subr.mxu0 0.0
    %106 = vmatpush1.msra.mxu0 0.0
    %107 = vmatprep.subr.mxu0 0.0
    %108 = vmatpush1.msra.mxu0 0.0
    %109 = vmatprep.subr.mxu0 0.0
    %110 = vmatpush1.msra.mxu0 0.0
    %111 = vmatprep.subr.mxu0 0.0
    %112 = vmatpush1.msra.mxu0 0.0
    %113 = vmatprep.subr.mxu0 0.0
    %114 = vmatpush1.msra.mxu0 0.0
    %115 = vmatprep.subr.mxu0 0.0
    %116 = vmatpush1.msra.mxu0 %v62
    %117 = vmatprep.subr.mxu0 0.0
    %118 = vmatpush1.msra.mxu0 %v61
    %119 = vmatprep.subr.mxu0 0.0
    %120 = vmatpush2.msra.mxu0 0.0
    %121 = vmatprep.subr.mxu0 0.0
    %122 = vmatpush2.msra.mxu0 0.0
    %123 = vmatprep.subr.mxu0 0.0
    %124 = vmatpush2.msra.mxu0 0.0
    %125 = vmatprep.subr.mxu0 0.0
    %126 = vmatpush2.msra.mxu0 0.0
    %127 = vmatprep.subr.mxu0 0.0
    %128 = vmatpush2.msra.mxu0 0.0
    %129 = vmatprep.subr.mxu0 0.0
    %130 = vmatpush2.msra.mxu0 0.0
    %131 = vmatprep.subr.mxu0 0.0
    %132 = vmatpush2.msra.mxu0 0.0
    %133 = vmatprep.subr.mxu0 0.0
    %134 = vmatpush2.msra.mxu0 0.0
    %135 = vmatprep.subr.mxu0 0.0
    %136 = vmatpush2.msra.mxu0 0.0
    %137 = vmatprep.subr.mxu0 0.0
    %138 = vmatpush2.msra.mxu0 0.0
    %139 = vmatprep.subr.mxu0 0.0
    %140 = vmatpush2.msra.mxu0 0.0
    %141 = vmatprep.subr.mxu0 0.0
    %142 = vmatpush2.msra.mxu0 0.0
    %143 = vmatprep.subr.mxu0 0.0
    %144 = vmatpush2.msra.mxu0 0.0
    %145 = vmatprep.subr.mxu0 0.0
    %146 = vmatpush2.msra.mxu0 0.0
    %147 = vmatprep.subr.mxu0 0.0
    %148 = vmatpush2.msra.mxu0 0.0
    %149 = vmatprep.subr.mxu0 0.0
    %150 = vmatpush2.msra.mxu0 0.0
    %151 = vmatprep.mubr.f32.mxu0 0.0
    %152 = vmatmul.mubr.f32.gmra.mxu0 %v82
    %v153 = vpop.f32.mrf.mxu0
    %v154 = vadd.f32 0.0, %v153
    %v155 = vpop.f32.mrf.mxu0
    %156 = vmatprep.mubr.f32.mxu0 0.0
    %157 = vmatmul.mubr.f32.gmra.mxu0 %v85
    %v158 = vpop.f32.mrf.mxu0
    %v159 = vadd.f32 0.0, %v158
    %v160 = vpop.f32.mrf.mxu0
    %161 = vdwg.mxu0
    %v162 = vlaneseq
    %v163 = vshrl.u32 %v162, 7
    %v164 = vsub.s32 0, %v163
    %v165 = vrot.slane %v79, %v164
    %166 = vmatprep.subr.mxu0 0.0
    %167 = vmatpush1.msra.mxu0 %v78
    %168 = vmatprep.subr.mxu0 0.0
    %169 = vmatpush1.msra.mxu0 %v77
    %170 = vmatprep.subr.mxu0 0.0
    %171 = vmatpush1.msra.mxu0 %v76
    %172 = vmatprep.subr.mxu0 0.0
    %173 = vmatpush1.msra.mxu0 %v75
    %174 = vmatprep.subr.mxu0 0.0
    %175 = vmatpush1.msra.mxu0 %v74
    %176 = vmatprep.subr.mxu0 0.0
    %177 = vmatpush1.msra.mxu0 %v73
    %178 = vmatprep.subr.mxu0 0.0
    %179 = vmatpush1.msra.mxu0 %v72
    %180 = vmatprep.subr.mxu0 0.0
    %181 = vmatpush1.msra.mxu0 %v71
    %182 = vmatprep.subr.mxu0 0.0
    %183 = vmatpush1.msra.mxu0 %v70
    %184 = vmatprep.subr.mxu0 0.0
    %185 = vmatpush1.msra.mxu0 %v69
    %186 = vmatprep.subr.mxu0 0.0
    %187 = vmatpush1.msra.mxu0 %v68
    %188 = vmatprep.subr.mxu0 0.0
    %189 = vmatpush1.msra.mxu0 %v67
    %190 = vmatprep.subr.mxu0 0.0
    %191 = vmatpush1.msra.mxu0 %v66
    %192 = vmatprep.subr.mxu0 0.0
    %193 = vmatpush1.msra.mxu0 %v65
    %194 = vmatprep.subr.mxu0 0.0
    %195 = vmatpush1.msra.mxu0 %v64
    %196 = vmatprep.subr.mxu0 0.0
    %197 = vmatpush1.msra.mxu0 %v63
    %198 = vmatprep.subr.mxu0 0.0
    %199 = vmatpush2.msra.mxu0 0.0
    %200 = vmatprep.subr.mxu0 0.0
    %201 = vmatpush2.msra.mxu0 0.0
    %202 = vmatprep.subr.mxu0 0.0
    %203 = vmatpush2.msra.mxu0 0.0
    %204 = vmatprep.subr.mxu0 0.0
    %205 = vmatpush2.msra.mxu0 0.0
    %206 = vmatprep.subr.mxu0 0.0
    %207 = vmatpush2.msra.mxu0 0.0
    %208 = vmatprep.subr.mxu0 0.0
    %209 = vmatpush2.msra.mxu0 0.0
    %210 = vmatprep.subr.mxu0 0.0
    %211 = vmatpush2.msra.mxu0 0.0
    %212 = vmatprep.subr.mxu0 0.0
    %213 = vmatpush2.msra.mxu0 0.0
    %214 = vmatprep.subr.mxu0 0.0
    %215 = vmatpush2.msra.mxu0 0.0
    %216 = vmatprep.subr.mxu0 0.0
    %217 = vmatpush2.msra.mxu0 0.0
    %218 = vmatprep.subr.mxu0 0.0
    %219 = vmatpush2.msra.mxu0 0.0
    %220 = vmatprep.subr.mxu0 0.0
    %221 = vmatpush2.msra.mxu0 0.0
    %222 = vmatprep.subr.mxu0 0.0
    %223 = vmatpush2.msra.mxu0 0.0
    %224 = vmatprep.subr.mxu0 0.0
    %225 = vmatpush2.msra.mxu0 0.0
    %226 = vmatprep.subr.mxu0 0.0
    %227 = vmatpush2.msra.mxu0 0.0
    %228 = vmatprep.subr.mxu0 0.0
    %229 = vmatpush2.msra.mxu0 0.0
    %230 = vmatprep.mubr.f32.mxu0 0.0
    %231 = vmatmul.mubr.f32.gmra.mxu0 %v154
    %v232 = vpop.f32.mrf.mxu0
    %v233 = vadd.f32 %v165, %v232
    %v234 = vpop.f32.mrf.mxu0
    %235 = vmatprep.mubr.f32.mxu0 0.0
    %236 = vmatmul.mubr.f32.gmra.mxu0 %v159
    %v237 = vpop.f32.mrf.mxu0
    %v238 = vadd.f32 %v165, %v237
    %v239 = vpop.f32.mrf.mxu0
    %240 = vdwg.mxu0
    %vm241 = vcmp.gt.f32.partialorder %v233, 0.0
    %vm242 = vcmp.gt.f32.partialorder %v238, 0.0
    %v243 = vmul.f32 %v233, 0.01
    %v244 = vmul.f32 %v238, 0.01
    %v245 = vsel %vm241, %v233, %v243
    %v246 = vsel %vm242, %v238, %v244
    %s247 = scalar_lea.vmem [#allocation7], 136
    %v248 = vld [vmem:[%s247] sm:$0xff]
    %v249 = vld [vmem:[%s247 + $0x8] sm:$0xff]
    %v250 = vld [vmem:[%s247 + $0x10] sm:$0xff]
    %v251 = vld [vmem:[%s247 + $0x18] sm:$0xff]
    %v252 = vld [vmem:[%s247 + $0x20] sm:$0xff]
    %v253 = vld [vmem:[%s247 + $0x28] sm:$0xff]
    %v254 = vld [vmem:[%s247 + $0x30] sm:$0xff]
    %v255 = vld [vmem:[%s247 + $0x38] sm:$0xff]
    %v256 = vld [vmem:[%s247 + $0x40] sm:$0xff]
    %v257 = vld [vmem:[%s247 + $0x48] sm:$0xff]
    %v258 = vld [vmem:[%s247 + $0x50] sm:$0xff]
    %v259 = vld [vmem:[%s247 + $0x58] sm:$0xff]
    %v260 = vld [vmem:[%s247 + $0x60] sm:$0xff]
    %v261 = vld [vmem:[%s247 + $0x68] sm:$0xff]
    %v262 = vld [vmem:[%s247 + $0x70] sm:$0xff]
    %v263 = vld [vmem:[%s247 + $0x78] sm:$0xff]
    %v264 = vld [vmem:[%s247 + $0x80] sm:$0x1]
    %265 = vmatprep.subr.mxu0 0.0
    %266 = vmatpush1.msra.mxu0 %v263
    %267 = vmatprep.subr.mxu0 0.0
    %268 = vmatpush1.msra.mxu0 %v262
    %269 = vmatprep.subr.mxu0 0.0
    %270 = vmatpush1.msra.mxu0 %v261
    %271 = vmatprep.subr.mxu0 0.0
    %272 = vmatpush1.msra.mxu0 %v260
    %273 = vmatprep.subr.mxu0 0.0
    %274 = vmatpush1.msra.mxu0 %v259
    %275 = vmatprep.subr.mxu0 0.0
    %276 = vmatpush1.msra.mxu0 %v258
    %277 = vmatprep.subr.mxu0 0.0
    %278 = vmatpush1.msra.mxu0 %v257
    %279 = vmatprep.subr.mxu0 0.0
    %280 = vmatpush1.msra.mxu0 %v256
    %281 = vmatprep.subr.mxu0 0.0
    %282 = vmatpush1.msra.mxu0 %v255
    %283 = vmatprep.subr.mxu0 0.0
    %284 = vmatpush1.msra.mxu0 %v254
    %285 = vmatprep.subr.mxu0 0.0
    %286 = vmatpush1.msra.mxu0 %v253
    %287 = vmatprep.subr.mxu0 0.0
    %288 = vmatpush1.msra.mxu0 %v252
    %289 = vmatprep.subr.mxu0 0.0
    %290 = vmatpush1.msra.mxu0 %v251
    %291 = vmatprep.subr.mxu0 0.0
    %292 = vmatpush1.msra.mxu0 %v250
    %293 = vmatprep.subr.mxu0 0.0
    %294 = vmatpush1.msra.mxu0 %v249
    %295 = vmatprep.subr.mxu0 0.0
    %296 = vmatpush1.msra.mxu0 %v248
    %297 = vmatprep.subr.mxu0 0.0
    %298 = vmatpush2.msra.mxu0 0.0
    %299 = vmatprep.subr.mxu0 0.0
    %300 = vmatpush2.msra.mxu0 0.0
    %301 = vmatprep.subr.mxu0 0.0
    %302 = vmatpush2.msra.mxu0 0.0
    %303 = vmatprep.subr.mxu0 0.0
    %304 = vmatpush2.msra.mxu0 0.0
    %305 = vmatprep.subr.mxu0 0.0
    %306 = vmatpush2.msra.mxu0 0.0
    %307 = vmatprep.subr.mxu0 0.0
    %308 = vmatpush2.msra.mxu0 0.0
    %309 = vmatprep.subr.mxu0 0.0
    %310 = vmatpush2.msra.mxu0 0.0
    %311 = vmatprep.subr.mxu0 0.0
    %312 = vmatpush2.msra.mxu0 0.0
    %313 = vmatprep.subr.mxu0 0.0
    %314 = vmatpush2.msra.mxu0 0.0
    %315 = vmatprep.subr.mxu0 0.0
    %316 = vmatpush2.msra.mxu0 0.0
    %317 = vmatprep.subr.mxu0 0.0
    %318 = vmatpush2.msra.mxu0 0.0
    %319 = vmatprep.subr.mxu0 0.0
    %320 = vmatpush2.msra.mxu0 0.0
    %321 = vmatprep.subr.mxu0 0.0
    %322 = vmatpush2.msra.mxu0 0.0
    %323 = vmatprep.subr.mxu0 0.0
    %324 = vmatpush2.msra.mxu0 0.0
    %325 = vmatprep.subr.mxu0 0.0
    %326 = vmatpush2.msra.mxu0 0.0
    %327 = vmatprep.subr.mxu0 0.0
    %328 = vmatpush2.msra.mxu0 0.0
    %329 = vmatprep.mubr.f32.mxu0 0.0
    %330 = vmatmul.mubr.f32.gmra.mxu0 %v245
    %v331 = vpop.f32.mrf.mxu0
    %v332 = vadd.f32 0.0, %v331
    %v333 = vpop.f32.mrf.mxu0
    %334 = vmatprep.mubr.f32.mxu0 0.0
    %335 = vmatmul.mubr.f32.gmra.mxu0 %v246
    %v336 = vpop.f32.mrf.mxu0
    %v337 = vadd.f32 0.0, %v336
    %v338 = vpop.f32.mrf.mxu0
    %339 = vdwg.mxu0
    %v340 = vlaneseq
    %v341 = vshrl.u32 %v340, 7
    %v342 = vsub.s32 0, %v341
    %v343 = vrot.slane %v264, %v342
    %344 = vmatprep.subr.mxu0 0.0
    %345 = vmatpush1.msra.mxu0 0.0
    %346 = vmatprep.subr.mxu0 0.0
    %347 = vmatpush1.msra.mxu0 0.0
    %348 = vmatprep.subr.mxu0 0.0
    %349 = vmatpush1.msra.mxu0 0.0
    %350 = vmatprep.subr.mxu0 0.0
    %351 = vmatpush1.msra.mxu0 0.0
    %352 = vmatprep.subr.mxu0 0.0
    %353 = vmatpush1.msra.mxu0 0.0
    %354 = vmatprep.subr.mxu0 0.0
    %355 = vmatpush1.msra.mxu0 0.0
    %356 = vmatprep.subr.mxu0 0.0
    %357 = vmatpush1.msra.mxu0 0.0
    %358 = vmatprep.subr.mxu0 0.0
    %359 = vmatpush1.msra.mxu0 0.0
    %360 = vmatprep.subr.mxu0 0.0
    %361 = vmatpush1.msra.mxu0 0.0
    %362 = vmatprep.subr.mxu0 0.0
    %363 = vmatpush1.msra.mxu0 0.0
    %364 = vmatprep.subr.mxu0 0.0
    %365 = vmatpush1.msra.mxu0 0.0
    %366 = vmatprep.subr.mxu0 0.0
    %367 = vmatpush1.msra.mxu0 0.0
    %368 = vmatprep.subr.mxu0 0.0
    %369 = vmatpush1.msra.mxu0 0.0
    %370 = vmatprep.subr.mxu0 0.0
    %371 = vmatpush1.msra.mxu0 0.0
    %372 = vmatprep.subr.mxu0 0.0
    %373 = vmatpush1.msra.mxu0 %v337
    %374 = vmatprep.subr.mxu0 0.0
    %375 = vmatpush1.msra.mxu0 %v332
    %376 = vmatprep.subr.mxu0 0.0
    %377 = vmatpush2.msra.mxu0 0.0
    %378 = vmatprep.subr.mxu0 0.0
    %379 = vmatpush2.msra.mxu0 0.0
    %380 = vmatprep.subr.mxu0 0.0
    %381 = vmatpush2.msra.mxu0 0.0
    %382 = vmatprep.subr.mxu0 0.0
    %383 = vmatpush2.msra.mxu0 0.0
    %384 = vmatprep.subr.mxu0 0.0
    %385 = vmatpush2.msra.mxu0 0.0
    %386 = vmatprep.subr.mxu0 0.0
    %387 = vmatpush2.msra.mxu0 0.0
    %388 = vmatprep.subr.mxu0 0.0
    %389 = vmatpush2.msra.mxu0 0.0
    %390 = vmatprep.subr.mxu0 0.0
    %391 = vmatpush2.msra.mxu0 0.0
    %392 = vmatprep.subr.mxu0 0.0
    %393 = vmatpush2.msra.mxu0 0.0
    %394 = vmatprep.subr.mxu0 0.0
    %395 = vmatpush2.msra.mxu0 0.0
    %396 = vmatprep.subr.mxu0 0.0
    %397 = vmatpush2.msra.mxu0 0.0
    %398 = vmatprep.subr.mxu0 0.0
    %399 = vmatpush2.msra.mxu0 0.0
    %400 = vmatprep.subr.mxu0 0.0
    %401 = vmatpush2.msra.mxu0 0.0
    %402 = vmatprep.subr.mxu0 0.0
    %403 = vmatpush2.msra.mxu0 0.0
    %404 = vmatprep.subr.mxu0 0.0
    %405 = vmatpush2.msra.mxu0 0.0
    %406 = vmatprep.subr.mxu0 0.0
    %407 = vmatpush2.msra.mxu0 0.0
    %408 = vmatprep.mubr.f32.mxu0 0.0
    %409 = vmatmul.mubr.f32.gmra.mxu0 %v82
    %v410 = vpop.f32.mrf.mxu0
    %v411 = vadd.f32 %v343, %v410
    %v412 = vpop.f32.mrf.mxu0
    %413 = vmatprep.mubr.f32.mxu0 0.0
    %414 = vmatmul.mubr.f32.gmra.mxu0 %v85
    %v415 = vpop.f32.mrf.mxu0
    %v416 = vadd.f32 %v343, %v415
    %v417 = vpop.f32.mrf.mxu0
    %418 = vdwg.mxu0
    %vm419 = vcmp.gt.f32.partialorder %v411, 0.0
    %vm420 = vcmp.gt.f32.partialorder %v416, 0.0
    %v421 = vmul.f32 %v411, 0.01
    %v422 = vmul.f32 %v416, 0.01
    %v423 = vsel %vm419, %v411, %v421
    %v424 = vsel %vm420, %v416, %v422
    %s425 = scalar_lea.vmem [#allocation7], 272
    %v426 = vld [vmem:[%s425] sm:$0xff]
    %v427 = vld [vmem:[%s425 + $0x8] sm:$0xff]
    %v428 = vld [vmem:[%s425 + $0x10] sm:$0xff]
    %v429 = vld [vmem:[%s425 + $0x18] sm:$0xff]
    %v430 = vld [vmem:[%s425 + $0x20] sm:$0xff]
    %v431 = vld [vmem:[%s425 + $0x28] sm:$0xff]
    %v432 = vld [vmem:[%s425 + $0x30] sm:$0xff]
    %v433 = vld [vmem:[%s425 + $0x38] sm:$0xff]
    %v434 = vld [vmem:[%s425 + $0x40] sm:$0xff]
    %v435 = vld [vmem:[%s425 + $0x48] sm:$0xff]
    %v436 = vld [vmem:[%s425 + $0x50] sm:$0xff]
    %v437 = vld [vmem:[%s425 + $0x58] sm:$0xff]
    %v438 = vld [vmem:[%s425 + $0x60] sm:$0xff]
    %v439 = vld [vmem:[%s425 + $0x68] sm:$0xff]
    %v440 = vld [vmem:[%s425 + $0x70] sm:$0xff]
    %v441 = vld [vmem:[%s425 + $0x78] sm:$0xff]
    %v442 = vld [vmem:[%s425 + $0x80] sm:$0x1]
    %443 = vmatprep.subr.mxu0 0.0
    %444 = vmatpush1.msra.mxu0 %v441
    %445 = vmatprep.subr.mxu0 0.0
    %446 = vmatpush1.msra.mxu0 %v440
    %447 = vmatprep.subr.mxu0 0.0
    %448 = vmatpush1.msra.mxu0 %v439
    %449 = vmatprep.subr.mxu0 0.0
    %450 = vmatpush1.msra.mxu0 %v438
    %451 = vmatprep.subr.mxu0 0.0
    %452 = vmatpush1.msra.mxu0 %v437
    %453 = vmatprep.subr.mxu0 0.0
    %454 = vmatpush1.msra.mxu0 %v436
    %455 = vmatprep.subr.mxu0 0.0
    %456 = vmatpush1.msra.mxu0 %v435
    %457 = vmatprep.subr.mxu0 0.0
    %458 = vmatpush1.msra.mxu0 %v434
    %459 = vmatprep.subr.mxu0 0.0
    %460 = vmatpush1.msra.mxu0 %v433
    %461 = vmatprep.subr.mxu0 0.0
    %462 = vmatpush1.msra.mxu0 %v432
    %463 = vmatprep.subr.mxu0 0.0
    %464 = vmatpush1.msra.mxu0 %v431
    %465 = vmatprep.subr.mxu0 0.0
    %466 = vmatpush1.msra.mxu0 %v430
    %467 = vmatprep.subr.mxu0 0.0
    %468 = vmatpush1.msra.mxu0 %v429
    %469 = vmatprep.subr.mxu0 0.0
    %470 = vmatpush1.msra.mxu0 %v428
    %471 = vmatprep.subr.mxu0 0.0
    %472 = vmatpush1.msra.mxu0 %v427
    %473 = vmatprep.subr.mxu0 0.0
    %474 = vmatpush1.msra.mxu0 %v426
    %475 = vmatprep.subr.mxu0 0.0
    %476 = vmatpush2.msra.mxu0 0.0
    %477 = vmatprep.subr.mxu0 0.0
    %478 = vmatpush2.msra.mxu0 0.0
    %479 = vmatprep.subr.mxu0 0.0
    %480 = vmatpush2.msra.mxu0 0.0
    %481 = vmatprep.subr.mxu0 0.0
    %482 = vmatpush2.msra.mxu0 0.0
    %483 = vmatprep.subr.mxu0 0.0
    %484 = vmatpush2.msra.mxu0 0.0
    %485 = vmatprep.subr.mxu0 0.0
    %486 = vmatpush2.msra.mxu0 0.0
    %487 = vmatprep.subr.mxu0 0.0
    %488 = vmatpush2.msra.mxu0 0.0
    %489 = vmatprep.subr.mxu0 0.0
    %490 = vmatpush2.msra.mxu0 0.0
    %491 = vmatprep.subr.mxu0 0.0
    %492 = vmatpush2.msra.mxu0 0.0
    %493 = vmatprep.subr.mxu0 0.0
    %494 = vmatpush2.msra.mxu0 0.0
    %495 = vmatprep.subr.mxu0 0.0
    %496 = vmatpush2.msra.mxu0 0.0
    %497 = vmatprep.subr.mxu0 0.0
    %498 = vmatpush2.msra.mxu0 0.0
    %499 = vmatprep.subr.mxu0 0.0
    %500 = vmatpush2.msra.mxu0 0.0
    %501 = vmatprep.subr.mxu0 0.0
    %502 = vmatpush2.msra.mxu0 0.0
    %503 = vmatprep.subr.mxu0 0.0
    %504 = vmatpush2.msra.mxu0 0.0
    %505 = vmatprep.subr.mxu0 0.0
    %506 = vmatpush2.msra.mxu0 0.0
    %507 = vmatprep.mubr.f32.mxu0 0.0
    %508 = vmatmul.mubr.f32.gmra.mxu0 %v423
    %v509 = vpop.f32.mrf.mxu0
    %v510 = vadd.f32 0.0, %v509
    %v511 = vpop.f32.mrf.mxu0
    %512 = vmatprep.mubr.f32.mxu0 0.0
    %513 = vmatmul.mubr.f32.gmra.mxu0 %v424
    %v514 = vpop.f32.mrf.mxu0
    %v515 = vadd.f32 0.0, %v514
    %v516 = vpop.f32.mrf.mxu0
    %517 = vdwg.mxu0
    %v518 = vlaneseq
    %v519 = vshrl.u32 %v518, 7
    %v520 = vsub.s32 0, %v519
    %v521 = vrot.slane %v442, %v520
    %522 = vmatprep.subr.mxu0 0.0
    %523 = vmatpush1.msra.mxu0 0.0
    %524 = vmatprep.subr.mxu0 0.0
    %525 = vmatpush1.msra.mxu0 0.0
    %526 = vmatprep.subr.mxu0 0.0
    %527 = vmatpush1.msra.mxu0 0.0
    %528 = vmatprep.subr.mxu0 0.0
    %529 = vmatpush1.msra.mxu0 0.0
    %530 = vmatprep.subr.mxu0 0.0
    %531 = vmatpush1.msra.mxu0 0.0
    %532 = vmatprep.subr.mxu0 0.0
    %533 = vmatpush1.msra.mxu0 0.0
    %534 = vmatprep.subr.mxu0 0.0
    %535 = vmatpush1.msra.mxu0 0.0
    %536 = vmatprep.subr.mxu0 0.0
    %537 = vmatpush1.msra.mxu0 0.0
    %538 = vmatprep.subr.mxu0 0.0
    %539 = vmatpush1.msra.mxu0 0.0
    %540 = vmatprep.subr.mxu0 0.0
    %541 = vmatpush1.msra.mxu0 0.0
    %542 = vmatprep.subr.mxu0 0.0
    %543 = vmatpush1.msra.mxu0 0.0
    %544 = vmatprep.subr.mxu0 0.0
    %545 = vmatpush1.msra.mxu0 0.0
    %546 = vmatprep.subr.mxu0 0.0
    %547 = vmatpush1.msra.mxu0 0.0
    %548 = vmatprep.subr.mxu0 0.0
    %549 = vmatpush1.msra.mxu0 0.0
    %550 = vmatprep.subr.mxu0 0.0
    %551 = vmatpush1.msra.mxu0 %v515
    %552 = vmatprep.subr.mxu0 0.0
    %553 = vmatpush1.msra.mxu0 %v510
    %554 = vmatprep.subr.mxu0 0.0
    %555 = vmatpush2.msra.mxu0 0.0
    %556 = vmatprep.subr.mxu0 0.0
    %557 = vmatpush2.msra.mxu0 0.0
    %558 = vmatprep.subr.mxu0 0.0
    %559 = vmatpush2.msra.mxu0 0.0
    %560 = vmatprep.subr.mxu0 0.0
    %561 = vmatpush2.msra.mxu0 0.0
    %562 = vmatprep.subr.mxu0 0.0
    %563 = vmatpush2.msra.mxu0 0.0
    %564 = vmatprep.subr.mxu0 0.0
    %565 = vmatpush2.msra.mxu0 0.0
    %566 = vmatprep.subr.mxu0 0.0
    %567 = vmatpush2.msra.mxu0 0.0
    %568 = vmatprep.subr.mxu0 0.0
    %569 = vmatpush2.msra.mxu0 0.0
    %570 = vmatprep.subr.mxu0 0.0
    %571 = vmatpush2.msra.mxu0 0.0
    %572 = vmatprep.subr.mxu0 0.0
    %573 = vmatpush2.msra.mxu0 0.0
    %574 = vmatprep.subr.mxu0 0.0
    %575 = vmatpush2.msra.mxu0 0.0
    %576 = vmatprep.subr.mxu0 0.0
    %577 = vmatpush2.msra.mxu0 0.0
    %578 = vmatprep.subr.mxu0 0.0
    %579 = vmatpush2.msra.mxu0 0.0
    %580 = vmatprep.subr.mxu0 0.0
    %581 = vmatpush2.msra.mxu0 0.0
    %582 = vmatprep.subr.mxu0 0.0
    %583 = vmatpush2.msra.mxu0 0.0
    %584 = vmatprep.subr.mxu0 0.0
    %585 = vmatpush2.msra.mxu0 0.0
    %586 = vmatprep.mubr.f32.mxu0 0.0
    %587 = vmatmul.mubr.f32.gmra.mxu0 %v82
    %v588 = vpop.f32.mrf.mxu0
    %v589 = vadd.f32 %v521, %v588
    %v590 = vpop.f32.mrf.mxu0
    %591 = vmatprep.mubr.f32.mxu0 0.0
    %592 = vmatmul.mubr.f32.gmra.mxu0 %v85
    %v593 = vpop.f32.mrf.mxu0
    %v594 = vadd.f32 %v521, %v593
    %v595 = vpop.f32.mrf.mxu0
    %596 = vdwg.mxu0
    %vm597 = vcmp.gt.f32.partialorder %v589, 0.0
    %vm598 = vcmp.gt.f32.partialorder %v594, 0.0
    %v599 = vmul.f32 %v589, 0.01
    %v600 = vmul.f32 %v594, 0.01
    %v601 = vsel %vm597, %v589, %v599
    %v602 = vsel %vm598, %v594, %v600
    %s603 = scalar_lea.vmem [#allocation7], 408
    %v604 = vld [vmem:[%s603] sm:$0xff]
    %v605 = vld [vmem:[%s603 + $0x8] sm:$0xff]
    %v606 = vld [vmem:[%s603 + $0x10] sm:$0xff]
    %v607 = vld [vmem:[%s603 + $0x18] sm:$0xff]
    %v608 = vld [vmem:[%s603 + $0x20] sm:$0xff]
    %v609 = vld [vmem:[%s603 + $0x28] sm:$0xff]
    %v610 = vld [vmem:[%s603 + $0x30] sm:$0xff]
    %v611 = vld [vmem:[%s603 + $0x38] sm:$0xff]
    %v612 = vld [vmem:[%s603 + $0x40] sm:$0xff]
    %v613 = vld [vmem:[%s603 + $0x48] sm:$0xff]
    %v614 = vld [vmem:[%s603 + $0x50] sm:$0xff]
    %v615 = vld [vmem:[%s603 + $0x58] sm:$0xff]
    %v616 = vld [vmem:[%s603 + $0x60] sm:$0xff]
    %v617 = vld [vmem:[%s603 + $0x68] sm:$0xff]
    %v618 = vld [vmem:[%s603 + $0x70] sm:$0xff]
    %v619 = vld [vmem:[%s603 + $0x78] sm:$0xff]
    %v620 = vld [vmem:[%s603 + $0x80] sm:$0x1]
    %621 = vmatprep.subr.mxu0 0.0
    %622 = vmatpush1.msra.mxu0 %v619
    %623 = vmatprep.subr.mxu0 0.0
    %624 = vmatpush1.msra.mxu0 %v618
    %625 = vmatprep.subr.mxu0 0.0
    %626 = vmatpush1.msra.mxu0 %v617
    %627 = vmatprep.subr.mxu0 0.0
    %628 = vmatpush1.msra.mxu0 %v616
    %629 = vmatprep.subr.mxu0 0.0
    %630 = vmatpush1.msra.mxu0 %v615
    %631 = vmatprep.subr.mxu0 0.0
    %632 = vmatpush1.msra.mxu0 %v614
    %633 = vmatprep.subr.mxu0 0.0
    %634 = vmatpush1.msra.mxu0 %v613
    %635 = vmatprep.subr.mxu0 0.0
    %636 = vmatpush1.msra.mxu0 %v612
    %637 = vmatprep.subr.mxu0 0.0
    %638 = vmatpush1.msra.mxu0 %v611
    %639 = vmatprep.subr.mxu0 0.0
    %640 = vmatpush1.msra.mxu0 %v610
    %641 = vmatprep.subr.mxu0 0.0
    %642 = vmatpush1.msra.mxu0 %v609
    %643 = vmatprep.subr.mxu0 0.0
    %644 = vmatpush1.msra.mxu0 %v608
    %645 = vmatprep.subr.mxu0 0.0
    %646 = vmatpush1.msra.mxu0 %v607
    %647 = vmatprep.subr.mxu0 0.0
    %648 = vmatpush1.msra.mxu0 %v606
    %649 = vmatprep.subr.mxu0 0.0
    %650 = vmatpush1.msra.mxu0 %v605
    %651 = vmatprep.subr.mxu0 0.0
    %652 = vmatpush1.msra.mxu0 %v604
    %653 = vmatprep.subr.mxu0 0.0
    %654 = vmatpush2.msra.mxu0 0.0
    %655 = vmatprep.subr.mxu0 0.0
    %656 = vmatpush2.msra.mxu0 0.0
    %657 = vmatprep.subr.mxu0 0.0
    %658 = vmatpush2.msra.mxu0 0.0
    %659 = vmatprep.subr.mxu0 0.0
    %660 = vmatpush2.msra.mxu0 0.0
    %661 = vmatprep.subr.mxu0 0.0
    %662 = vmatpush2.msra.mxu0 0.0
    %663 = vmatprep.subr.mxu0 0.0
    %664 = vmatpush2.msra.mxu0 0.0
    %665 = vmatprep.subr.mxu0 0.0
    %666 = vmatpush2.msra.mxu0 0.0
    %667 = vmatprep.subr.mxu0 0.0
    %668 = vmatpush2.msra.mxu0 0.0
    %669 = vmatprep.subr.mxu0 0.0
    %670 = vmatpush2.msra.mxu0 0.0
    %671 = vmatprep.subr.mxu0 0.0
    %672 = vmatpush2.msra.mxu0 0.0
    %673 = vmatprep.subr.mxu0 0.0
    %674 = vmatpush2.msra.mxu0 0.0
    %675 = vmatprep.subr.mxu0 0.0
    %676 = vmatpush2.msra.mxu0 0.0
    %677 = vmatprep.subr.mxu0 0.0
    %678 = vmatpush2.msra.mxu0 0.0
    %679 = vmatprep.subr.mxu0 0.0
    %680 = vmatpush2.msra.mxu0 0.0
    %681 = vmatprep.subr.mxu0 0.0
    %682 = vmatpush2.msra.mxu0 0.0
    %683 = vmatprep.subr.mxu0 0.0
    %684 = vmatpush2.msra.mxu0 0.0
    %685 = vmatprep.mubr.f32.mxu0 0.0
    %686 = vmatmul.mubr.f32.gmra.mxu0 %v601
    %v687 = vpop.f32.mrf.mxu0
    %v688 = vadd.f32 0.0, %v687
    %v689 = vpop.f32.mrf.mxu0
    %690 = vmatprep.mubr.f32.mxu0 0.0
    %691 = vmatmul.mubr.f32.gmra.mxu0 %v602
    %v692 = vpop.f32.mrf.mxu0
    %v693 = vadd.f32 0.0, %v692
    %v694 = vpop.f32.mrf.mxu0
    %695 = vdwg.mxu0
    %v696 = vlaneseq
    %v697 = vshrl.u32 %v696, 7
    %v698 = vsub.s32 0, %v697
    %v699 = vrot.slane %v620, %v698
    %700 = vmatprep.subr.mxu0 0.0
    %701 = vmatpush1.msra.mxu0 0.0
    %702 = vmatprep.subr.mxu0 0.0
    %703 = vmatpush1.msra.mxu0 0.0
    %704 = vmatprep.subr.mxu0 0.0
    %705 = vmatpush1.msra.mxu0 0.0
    %706 = vmatprep.subr.mxu0 0.0
    %707 = vmatpush1.msra.mxu0 0.0
    %708 = vmatprep.subr.mxu0 0.0
    %709 = vmatpush1.msra.mxu0 0.0
    %710 = vmatprep.subr.mxu0 0.0
    %711 = vmatpush1.msra.mxu0 0.0
    %712 = vmatprep.subr.mxu0 0.0
    %713 = vmatpush1.msra.mxu0 0.0
    %714 = vmatprep.subr.mxu0 0.0
    %715 = vmatpush1.msra.mxu0 0.0
    %716 = vmatprep.subr.mxu0 0.0
    %717 = vmatpush1.msra.mxu0 0.0
    %718 = vmatprep.subr.mxu0 0.0
    %719 = vmatpush1.msra.mxu0 0.0
    %720 = vmatprep.subr.mxu0 0.0
    %721 = vmatpush1.msra.mxu0 0.0
    %722 = vmatprep.subr.mxu0 0.0
    %723 = vmatpush1.msra.mxu0 0.0
    %724 = vmatprep.subr.mxu0 0.0
    %725 = vmatpush1.msra.mxu0 0.0
    %726 = vmatprep.subr.mxu0 0.0
    %727 = vmatpush1.msra.mxu0 0.0
    %728 = vmatprep.subr.mxu0 0.0
    %729 = vmatpush1.msra.mxu0 %v693
    %730 = vmatprep.subr.mxu0 0.0
    %731 = vmatpush1.msra.mxu0 %v688
    %732 = vmatprep.subr.mxu0 0.0
    %733 = vmatpush2.msra.mxu0 0.0
    %734 = vmatprep.subr.mxu0 0.0
    %735 = vmatpush2.msra.mxu0 0.0
    %736 = vmatprep.subr.mxu0 0.0
    %737 = vmatpush2.msra.mxu0 0.0
    %738 = vmatprep.subr.mxu0 0.0
    %739 = vmatpush2.msra.mxu0 0.0
    %740 = vmatprep.subr.mxu0 0.0
    %741 = vmatpush2.msra.mxu0 0.0
    %742 = vmatprep.subr.mxu0 0.0
    %743 = vmatpush2.msra.mxu0 0.0
    %744 = vmatprep.subr.mxu0 0.0
    %745 = vmatpush2.msra.mxu0 0.0
    %746 = vmatprep.subr.mxu0 0.0
    %747 = vmatpush2.msra.mxu0 0.0
    %748 = vmatprep.subr.mxu0 0.0
    %749 = vmatpush2.msra.mxu0 0.0
    %750 = vmatprep.subr.mxu0 0.0
    %751 = vmatpush2.msra.mxu0 0.0
    %752 = vmatprep.subr.mxu0 0.0
    %753 = vmatpush2.msra.mxu0 0.0
    %754 = vmatprep.subr.mxu0 0.0
    %755 = vmatpush2.msra.mxu0 0.0
    %756 = vmatprep.subr.mxu0 0.0
    %757 = vmatpush2.msra.mxu0 0.0
    %758 = vmatprep.subr.mxu0 0.0
    %759 = vmatpush2.msra.mxu0 0.0
    %760 = vmatprep.subr.mxu0 0.0
    %761 = vmatpush2.msra.mxu0 0.0
    %762 = vmatprep.subr.mxu0 0.0
    %763 = vmatpush2.msra.mxu0 0.0
    %764 = vmatprep.mubr.f32.mxu0 0.0
    %765 = vmatmul.mubr.f32.gmra.mxu0 %v82
    %v766 = vpop.f32.mrf.mxu0
    %v767 = vadd.f32 %v699, %v766
    %v768 = vpop.f32.mrf.mxu0
    %769 = vmatprep.mubr.f32.mxu0 0.0
    %770 = vmatmul.mubr.f32.gmra.mxu0 %v85
    %v771 = vpop.f32.mrf.mxu0
    %v772 = vadd.f32 %v699, %v771
    %v773 = vpop.f32.mrf.mxu0
    %774 = vdwg.mxu0
    %775 = vst [vmem:[#allocation8] sm:$0xff] %v767
    %776 = vst [vmem:[#allocation8 + $0x8] sm:$0xff] %v772
    %s777 = scalar_lea.vmem [#allocation7], 544
    %v778 = vld [vmem:[%s777] sm:$0xff]
    %v779 = vld [vmem:[%s777 + $0x8] sm:$0xff]
    %v780 = vld [vmem:[%s777 + $0x10] sm:$0xff]
    %v781 = vld [vmem:[%s777 + $0x18] sm:$0xff]
    %v782 = vld [vmem:[%s777 + $0x20] sm:$0xff]
    %v783 = vld [vmem:[%s777 + $0x28] sm:$0xff]
    %v784 = vld [vmem:[%s777 + $0x30] sm:$0xff]
    %v785 = vld [vmem:[%s777 + $0x38] sm:$0xff]
    %v786 = vld [vmem:[%s777 + $0x40] sm:$0xff]
    %v787 = vld [vmem:[%s777 + $0x48] sm:$0xff]
    %v788 = vld [vmem:[%s777 + $0x50] sm:$0xff]
    %v789 = vld [vmem:[%s777 + $0x58] sm:$0xff]
    %v790 = vld [vmem:[%s777 + $0x60] sm:$0xff]
    %v791 = vld [vmem:[%s777 + $0x68] sm:$0xff]
    %v792 = vld [vmem:[%s777 + $0x70] sm:$0xff]
    %v793 = vld [vmem:[%s777 + $0x78] sm:$0xff]
    %v794 = vld [vmem:[%s777 + $0x80] sm:$0x1]
    %795 = vmatprep.subr.mxu0 0.0
    %796 = vmatpush1.msra.mxu0 0.0
    %797 = vmatprep.subr.mxu0 0.0
    %798 = vmatpush1.msra.mxu0 0.0
    %799 = vmatprep.subr.mxu0 0.0
    %800 = vmatpush1.msra.mxu0 0.0
    %801 = vmatprep.subr.mxu0 0.0
    %802 = vmatpush1.msra.mxu0 0.0
    %803 = vmatprep.subr.mxu0 0.0
    %804 = vmatpush1.msra.mxu0 0.0
    %805 = vmatprep.subr.mxu0 0.0
    %806 = vmatpush1.msra.mxu0 0.0
    %807 = vmatprep.subr.mxu0 0.0
    %808 = vmatpush1.msra.mxu0 0.0
    %809 = vmatprep.subr.mxu0 0.0
    %810 = vmatpush1.msra.mxu0 0.0
    %811 = vmatprep.subr.mxu0 0.0
    %812 = vmatpush1.msra.mxu0 0.0
    %813 = vmatprep.subr.mxu0 0.0
    %814 = vmatpush1.msra.mxu0 0.0
    %815 = vmatprep.subr.mxu0 0.0
    %816 = vmatpush1.msra.mxu0 0.0
    %817 = vmatprep.subr.mxu0 0.0
    %818 = vmatpush1.msra.mxu0 0.0
    %819 = vmatprep.subr.mxu0 0.0
    %820 = vmatpush1.msra.mxu0 0.0
    %821 = vmatprep.subr.mxu0 0.0
    %822 = vmatpush1.msra.mxu0 0.0
    %823 = vmatprep.subr.mxu0 0.0
    %824 = vmatpush1.msra.mxu0 %v772
    %825 = vmatprep.subr.mxu0 0.0
    %826 = vmatpush1.msra.mxu0 %v767
    %827 = vmatprep.subr.mxu0 0.0
    %828 = vmatpush2.msra.mxu0 0.0
    %829 = vmatprep.subr.mxu0 0.0
    %830 = vmatpush2.msra.mxu0 0.0
    %831 = vmatprep.subr.mxu0 0.0
    %832 = vmatpush2.msra.mxu0 0.0
    %833 = vmatprep.subr.mxu0 0.0
    %834 = vmatpush2.msra.mxu0 0.0
    %835 = vmatprep.subr.mxu0 0.0
    %836 = vmatpush2.msra.mxu0 0.0
    %837 = vmatprep.subr.mxu0 0.0
    %838 = vmatpush2.msra.mxu0 0.0
    %839 = vmatprep.subr.mxu0 0.0
    %840 = vmatpush2.msra.mxu0 0.0
    %841 = vmatprep.subr.mxu0 0.0
    %842 = vmatpush2.msra.mxu0 0.0
    %843 = vmatprep.subr.mxu0 0.0
    %844 = vmatpush2.msra.mxu0 0.0
    %845 = vmatprep.subr.mxu0 0.0
    %846 = vmatpush2.msra.mxu0 0.0
    %847 = vmatprep.subr.mxu0 0.0
    %848 = vmatpush2.msra.mxu0 0.0
    %849 = vmatprep.subr.mxu0 0.0
    %850 = vmatpush2.msra.mxu0 0.0
    %851 = vmatprep.subr.mxu0 0.0
    %852 = vmatpush2.msra.mxu0 0.0
    %853 = vmatprep.subr.mxu0 0.0
    %854 = vmatpush2.msra.mxu0 0.0
    %855 = vmatprep.subr.mxu0 0.0
    %856 = vmatpush2.msra.mxu0 0.0
    %857 = vmatprep.subr.mxu0 0.0
    %858 = vmatpush2.msra.mxu0 0.0
    %859 = vmatprep.mubr.f32.mxu0 0.0
    %860 = vmatmul.mubr.f32.gmra.mxu0 %v82
    %v861 = vpop.f32.mrf.mxu0
    %v862 = vadd.f32 0.0, %v861
    %v863 = vpop.f32.mrf.mxu0
    %864 = vmatprep.mubr.f32.mxu0 0.0
    %865 = vmatmul.mubr.f32.gmra.mxu0 %v85
    %v866 = vpop.f32.mrf.mxu0
    %v867 = vadd.f32 0.0, %v866
    %v868 = vpop.f32.mrf.mxu0
    %869 = vdwg.mxu0
    %v870 = vlaneseq
    %v871 = vshrl.u32 %v870, 7
    %v872 = vsub.s32 0, %v871
    %v873 = vrot.slane %v794, %v872
    %874 = vmatprep.subr.mxu0 0.0
    %875 = vmatpush1.msra.mxu0 %v793
    %876 = vmatprep.subr.mxu0 0.0
    %877 = vmatpush1.msra.mxu0 %v792
    %878 = vmatprep.subr.mxu0 0.0
    %879 = vmatpush1.msra.mxu0 %v791
    %880 = vmatprep.subr.mxu0 0.0
    %881 = vmatpush1.msra.mxu0 %v790
    %882 = vmatprep.subr.mxu0 0.0
    %883 = vmatpush1.msra.mxu0 %v789
    %884 = vmatprep.subr.mxu0 0.0
    %885 = vmatpush1.msra.mxu0 %v788
    %886 = vmatprep.subr.mxu0 0.0
    %887 = vmatpush1.msra.mxu0 %v787
    %888 = vmatprep.subr.mxu0 0.0
    %889 = vmatpush1.msra.mxu0 %v786
    %890 = vmatprep.subr.mxu0 0.0
    %891 = vmatpush1.msra.mxu0 %v785
    %892 = vmatprep.subr.mxu0 0.0
    %893 = vmatpush1.msra.mxu0 %v784
    %894 = vmatprep.subr.mxu0 0.0
    %895 = vmatpush1.msra.mxu0 %v783
    %896 = vmatprep.subr.mxu0 0.0
    %897 = vmatpush1.msra.mxu0 %v782
    %898 = vmatprep.subr.mxu0 0.0
    %899 = vmatpush1.msra.mxu0 %v781
    %900 = vmatprep.subr.mxu0 0.0
    %901 = vmatpush1.msra.mxu0 %v780
    %902 = vmatprep.subr.mxu0 0.0
    %903 = vmatpush1.msra.mxu0 %v779
    %904 = vmatprep.subr.mxu0 0.0
    %905 = vmatpush1.msra.mxu0 %v778
    %906 = vmatprep.subr.mxu0 0.0
    %907 = vmatpush2.msra.mxu0 0.0
    %908 = vmatprep.subr.mxu0 0.0
    %909 = vmatpush2.msra.mxu0 0.0
    %910 = vmatprep.subr.mxu0 0.0
    %911 = vmatpush2.msra.mxu0 0.0
    %912 = vmatprep.subr.mxu0 0.0
    %913 = vmatpush2.msra.mxu0 0.0
    %914 = vmatprep.subr.mxu0 0.0
    %915 = vmatpush2.msra.mxu0 0.0
    %916 = vmatprep.subr.mxu0 0.0
    %917 = vmatpush2.msra.mxu0 0.0
    %918 = vmatprep.subr.mxu0 0.0
    %919 = vmatpush2.msra.mxu0 0.0
    %920 = vmatprep.subr.mxu0 0.0
    %921 = vmatpush2.msra.mxu0 0.0
    %922 = vmatprep.subr.mxu0 0.0
    %923 = vmatpush2.msra.mxu0 0.0
    %924 = vmatprep.subr.mxu0 0.0
    %925 = vmatpush2.msra.mxu0 0.0
    %926 = vmatprep.subr.mxu0 0.0
    %927 = vmatpush2.msra.mxu0 0.0
    %928 = vmatprep.subr.mxu0 0.0
    %929 = vmatpush2.msra.mxu0 0.0
    %930 = vmatprep.subr.mxu0 0.0
    %931 = vmatpush2.msra.mxu0 0.0
    %932 = vmatprep.subr.mxu0 0.0
    %933 = vmatpush2.msra.mxu0 0.0
    %934 = vmatprep.subr.mxu0 0.0
    %935 = vmatpush2.msra.mxu0 0.0
    %936 = vmatprep.subr.mxu0 0.0
    %937 = vmatpush2.msra.mxu0 0.0
    %938 = vmatprep.mubr.f32.mxu0 0.0
    %939 = vmatmul.mubr.f32.gmra.mxu0 %v862
    %v940 = vpop.f32.mrf.mxu0
    %v941 = vadd.f32 %v873, %v940
    %v942 = vpop.f32.mrf.mxu0
    %943 = vmatprep.mubr.f32.mxu0 0.0
    %944 = vmatmul.mubr.f32.gmra.mxu0 %v867
    %v945 = vpop.f32.mrf.mxu0
    %v946 = vadd.f32 %v873, %v945
    %v947 = vpop.f32.mrf.mxu0
    %948 = vdwg.mxu0
    %vm949 = vcmp.gt.f32.partialorder %v941, 0.0
    %vm950 = vcmp.gt.f32.partialorder %v946, 0.0
    %v951 = vmul.f32 %v941, 0.01
    %v952 = vmul.f32 %v946, 0.01
    %v953 = vsel %vm949, %v941, %v951
    %v954 = vsel %vm950, %v946, %v952
    %s955 = scalar_lea.vmem [#allocation7], 680
    %v956 = vld [vmem:[%s955] sm:$0xff]
    %v957 = vld [vmem:[%s955 + $0x8] sm:$0xff]
    %v958 = vld [vmem:[%s955 + $0x10] sm:$0xff]
    %v959 = vld [vmem:[%s955 + $0x18] sm:$0xff]
    %v960 = vld [vmem:[%s955 + $0x20] sm:$0xff]
    %v961 = vld [vmem:[%s955 + $0x28] sm:$0xff]
    %v962 = vld [vmem:[%s955 + $0x30] sm:$0xff]
    %v963 = vld [vmem:[%s955 + $0x38] sm:$0xff]
    %v964 = vld [vmem:[%s955 + $0x40] sm:$0xff]
    %v965 = vld [vmem:[%s955 + $0x48] sm:$0xff]
    %v966 = vld [vmem:[%s955 + $0x50] sm:$0xff]
    %v967 = vld [vmem:[%s955 + $0x58] sm:$0xff]
    %v968 = vld [vmem:[%s955 + $0x60] sm:$0xff]
    %v969 = vld [vmem:[%s955 + $0x68] sm:$0xff]
    %v970 = vld [vmem:[%s955 + $0x70] sm:$0xff]
    %v971 = vld [vmem:[%s955 + $0x78] sm:$0xff]
    %v972 = vld [vmem:[%s955 + $0x80] sm:$0x1]
    %973 = vmatprep.subr.mxu0 0.0
    %974 = vmatpush1.msra.mxu0 0.0
    %975 = vmatprep.subr.mxu0 0.0
    %976 = vmatpush1.msra.mxu0 0.0
    %977 = vmatprep.subr.mxu0 0.0
    %978 = vmatpush1.msra.mxu0 0.0
    %979 = vmatprep.subr.mxu0 0.0
    %980 = vmatpush1.msra.mxu0 0.0
    %981 = vmatprep.subr.mxu0 0.0
    %982 = vmatpush1.msra.mxu0 0.0
    %983 = vmatprep.subr.mxu0 0.0
    %984 = vmatpush1.msra.mxu0 0.0
    %985 = vmatprep.subr.mxu0 0.0
    %986 = vmatpush1.msra.mxu0 0.0
    %987 = vmatprep.subr.mxu0 0.0
    %988 = vmatpush1.msra.mxu0 0.0
    %989 = vmatprep.subr.mxu0 0.0
    %990 = vmatpush1.msra.mxu0 0.0
    %991 = vmatprep.subr.mxu0 0.0
    %992 = vmatpush1.msra.mxu0 0.0
    %993 = vmatprep.subr.mxu0 0.0
    %994 = vmatpush1.msra.mxu0 0.0
    %995 = vmatprep.subr.mxu0 0.0
    %996 = vmatpush1.msra.mxu0 0.0
    %997 = vmatprep.subr.mxu0 0.0
    %998 = vmatpush1.msra.mxu0 0.0
    %999 = vmatprep.subr.mxu0 0.0
    %1000 = vmatpush1.msra.mxu0 0.0
    %1001 = vmatprep.subr.mxu0 0.0
    %1002 = vmatpush1.msra.mxu0 %v954
    %1003 = vmatprep.subr.mxu0 0.0
    %1004 = vmatpush1.msra.mxu0 %v953
    %1005 = vmatprep.subr.mxu0 0.0
    %1006 = vmatpush2.msra.mxu0 0.0
    %1007 = vmatprep.subr.mxu0 0.0
    %1008 = vmatpush2.msra.mxu0 0.0
    %1009 = vmatprep.subr.mxu0 0.0
    %1010 = vmatpush2.msra.mxu0 0.0
    %1011 = vmatprep.subr.mxu0 0.0
    %1012 = vmatpush2.msra.mxu0 0.0
    %1013 = vmatprep.subr.mxu0 0.0
    %1014 = vmatpush2.msra.mxu0 0.0
    %1015 = vmatprep.subr.mxu0 0.0
    %1016 = vmatpush2.msra.mxu0 0.0
    %1017 = vmatprep.subr.mxu0 0.0
    %1018 = vmatpush2.msra.mxu0 0.0
    %1019 = vmatprep.subr.mxu0 0.0
    %1020 = vmatpush2.msra.mxu0 0.0
    %1021 = vmatprep.subr.mxu0 0.0
    %1022 = vmatpush2.msra.mxu0 0.0
    %1023 = vmatprep.subr.mxu0 0.0
    %1024 = vmatpush2.msra.mxu0 0.0
    %1025 = vmatprep.subr.mxu0 0.0
    %1026 = vmatpush2.msra.mxu0 0.0
    %1027 = vmatprep.subr.mxu0 0.0
    %1028 = vmatpush2.msra.mxu0 0.0
    %1029 = vmatprep.subr.mxu0 0.0
    %1030 = vmatpush2.msra.mxu0 0.0
    %1031 = vmatprep.subr.mxu0 0.0
    %1032 = vmatpush2.msra.mxu0 0.0
    %1033 = vmatprep.subr.mxu0 0.0
    %1034 = vmatpush2.msra.mxu0 0.0
    %1035 = vmatprep.subr.mxu0 0.0
    %1036 = vmatpush2.msra.mxu0 0.0
    %1037 = vmatprep.mubr.f32.mxu0 0.0
    %1038 = vmatmul.mubr.f32.gmra.mxu0 %v82
    %v1039 = vpop.f32.mrf.mxu0
    %v1040 = vadd.f32 0.0, %v1039
    %v1041 = vpop.f32.mrf.mxu0
    %1042 = vmatprep.mubr.f32.mxu0 0.0
    %1043 = vmatmul.mubr.f32.gmra.mxu0 %v85
    %v1044 = vpop.f32.mrf.mxu0
    %v1045 = vadd.f32 0.0, %v1044
    %v1046 = vpop.f32.mrf.mxu0
    %1047 = vdwg.mxu0
    %v1048 = vlaneseq
    %v1049 = vshrl.u32 %v1048, 7
    %v1050 = vsub.s32 0, %v1049
    %v1051 = vrot.slane %v972, %v1050
    %1052 = vmatprep.subr.mxu0 0.0
    %1053 = vmatpush1.msra.mxu0 %v971
    %1054 = vmatprep.subr.mxu0 0.0
    %1055 = vmatpush1.msra.mxu0 %v970
    %1056 = vmatprep.subr.mxu0 0.0
    %1057 = vmatpush1.msra.mxu0 %v969
    %1058 = vmatprep.subr.mxu0 0.0
    %1059 = vmatpush1.msra.mxu0 %v968
    %1060 = vmatprep.subr.mxu0 0.0
    %1061 = vmatpush1.msra.mxu0 %v967
    %1062 = vmatprep.subr.mxu0 0.0
    %1063 = vmatpush1.msra.mxu0 %v966
    %1064 = vmatprep.subr.mxu0 0.0
    %1065 = vmatpush1.msra.mxu0 %v965
    %1066 = vmatprep.subr.mxu0 0.0
    %1067 = vmatpush1.msra.mxu0 %v964
    %1068 = vmatprep.subr.mxu0 0.0
    %1069 = vmatpush1.msra.mxu0 %v963
    %1070 = vmatprep.subr.mxu0 0.0
    %1071 = vmatpush1.msra.mxu0 %v962
    %1072 = vmatprep.subr.mxu0 0.0
    %1073 = vmatpush1.msra.mxu0 %v961
    %1074 = vmatprep.subr.mxu0 0.0
    %1075 = vmatpush1.msra.mxu0 %v960
    %1076 = vmatprep.subr.mxu0 0.0
    %1077 = vmatpush1.msra.mxu0 %v959
    %1078 = vmatprep.subr.mxu0 0.0
    %1079 = vmatpush1.msra.mxu0 %v958
    %1080 = vmatprep.subr.mxu0 0.0
    %1081 = vmatpush1.msra.mxu0 %v957
    %1082 = vmatprep.subr.mxu0 0.0
    %1083 = vmatpush1.msra.mxu0 %v956
    %1084 = vmatprep.subr.mxu0 0.0
    %1085 = vmatpush2.msra.mxu0 0.0
    %1086 = vmatprep.subr.mxu0 0.0
    %1087 = vmatpush2.msra.mxu0 0.0
    %1088 = vmatprep.subr.mxu0 0.0
    %1089 = vmatpush2.msra.mxu0 0.0
    %1090 = vmatprep.subr.mxu0 0.0
    %1091 = vmatpush2.msra.mxu0 0.0
    %1092 = vmatprep.subr.mxu0 0.0
    %1093 = vmatpush2.msra.mxu0 0.0
    %1094 = vmatprep.subr.mxu0 0.0
    %1095 = vmatpush2.msra.mxu0 0.0
    %1096 = vmatprep.subr.mxu0 0.0
    %1097 = vmatpush2.msra.mxu0 0.0
    %1098 = vmatprep.subr.mxu0 0.0
    %1099 = vmatpush2.msra.mxu0 0.0
    %1100 = vmatprep.subr.mxu0 0.0
    %1101 = vmatpush2.msra.mxu0 0.0
    %1102 = vmatprep.subr.mxu0 0.0
    %1103 = vmatpush2.msra.mxu0 0.0
    %1104 = vmatprep.subr.mxu0 0.0
    %1105 = vmatpush2.msra.mxu0 0.0
    %1106 = vmatprep.subr.mxu0 0.0
    %1107 = vmatpush2.msra.mxu0 0.0
    %1108 = vmatprep.subr.mxu0 0.0
    %1109 = vmatpush2.msra.mxu0 0.0
    %1110 = vmatprep.subr.mxu0 0.0
    %1111 = vmatpush2.msra.mxu0 0.0
    %1112 = vmatprep.subr.mxu0 0.0
    %1113 = vmatpush2.msra.mxu0 0.0
    %1114 = vmatprep.subr.mxu0 0.0
    %1115 = vmatpush2.msra.mxu0 0.0
    %1116 = vmatprep.mubr.f32.mxu0 0.0
    %1117 = vmatmul.mubr.f32.gmra.mxu0 %v1040
    %v1118 = vpop.f32.mrf.mxu0
    %v1119 = vadd.f32 %v1051, %v1118
    %v1120 = vpop.f32.mrf.mxu0
    %1121 = vmatprep.mubr.f32.mxu0 0.0
    %1122 = vmatmul.mubr.f32.gmra.mxu0 %v1045
    %v1123 = vpop.f32.mrf.mxu0
    %v1124 = vadd.f32 %v1051, %v1123
    %v1125 = vpop.f32.mrf.mxu0
    %1126 = vdwg.mxu0
    %vm1127 = vcmp.gt.f32.partialorder %v1119, 0.0
    %vm1128 = vcmp.gt.f32.partialorder %v1124, 0.0
    %v1129 = vmul.f32 %v1119, 0.01
    %v1130 = vmul.f32 %v1124, 0.01
    %v1131 = vsel %vm1127, %v1119, %v1129
    %v1132 = vsel %vm1128, %v1124, %v1130
    %s1133 = scalar_lea.vmem [#allocation7], 816
    %v1134 = vld [vmem:[%s1133] sm:$0xff]
    %v1135 = vld [vmem:[%s1133 + $0x8] sm:$0xff]
    %v1136 = vld [vmem:[%s1133 + $0x10] sm:$0xff]
    %v1137 = vld [vmem:[%s1133 + $0x18] sm:$0xff]
    %v1138 = vld [vmem:[%s1133 + $0x20] sm:$0xff]
    %v1139 = vld [vmem:[%s1133 + $0x28] sm:$0xff]
    %v1140 = vld [vmem:[%s1133 + $0x30] sm:$0xff]
    %v1141 = vld [vmem:[%s1133 + $0x38] sm:$0xff]
    %v1142 = vld [vmem:[%s1133 + $0x40] sm:$0xff]
    %v1143 = vld [vmem:[%s1133 + $0x48] sm:$0xff]
    %v1144 = vld [vmem:[%s1133 + $0x50] sm:$0xff]
    %v1145 = vld [vmem:[%s1133 + $0x58] sm:$0xff]
    %v1146 = vld [vmem:[%s1133 + $0x60] sm:$0xff]
    %v1147 = vld [vmem:[%s1133 + $0x68] sm:$0xff]
    %v1148 = vld [vmem:[%s1133 + $0x70] sm:$0xff]
    %v1149 = vld [vmem:[%s1133 + $0x78] sm:$0xff]
    %v1150 = vld [vmem:[%s1133 + $0x80] sm:$0x1]
    %1151 = vmatprep.subr.mxu0 0.0
    %1152 = vmatpush1.msra.mxu0 0.0
    %1153 = vmatprep.subr.mxu0 0.0
    %1154 = vmatpush1.msra.mxu0 0.0
    %1155 = vmatprep.subr.mxu0 0.0
    %1156 = vmatpush1.msra.mxu0 0.0
    %1157 = vmatprep.subr.mxu0 0.0
    %1158 = vmatpush1.msra.mxu0 0.0
    %1159 = vmatprep.subr.mxu0 0.0
    %1160 = vmatpush1.msra.mxu0 0.0
    %1161 = vmatprep.subr.mxu0 0.0
    %1162 = vmatpush1.msra.mxu0 0.0
    %1163 = vmatprep.subr.mxu0 0.0
    %1164 = vmatpush1.msra.mxu0 0.0
    %1165 = vmatprep.subr.mxu0 0.0
    %1166 = vmatpush1.msra.mxu0 0.0
    %1167 = vmatprep.subr.mxu0 0.0
    %1168 = vmatpush1.msra.mxu0 0.0
    %1169 = vmatprep.subr.mxu0 0.0
    %1170 = vmatpush1.msra.mxu0 0.0
    %1171 = vmatprep.subr.mxu0 0.0
    %1172 = vmatpush1.msra.mxu0 0.0
    %1173 = vmatprep.subr.mxu0 0.0
    %1174 = vmatpush1.msra.mxu0 0.0
    %1175 = vmatprep.subr.mxu0 0.0
    %1176 = vmatpush1.msra.mxu0 0.0
    %1177 = vmatprep.subr.mxu0 0.0
    %1178 = vmatpush1.msra.mxu0 0.0
    %1179 = vmatprep.subr.mxu0 0.0
    %1180 = vmatpush1.msra.mxu0 %v1132
    %1181 = vmatprep.subr.mxu0 0.0
    %1182 = vmatpush1.msra.mxu0 %v1131
    %1183 = vmatprep.subr.mxu0 0.0
    %1184 = vmatpush2.msra.mxu0 0.0
    %1185 = vmatprep.subr.mxu0 0.0
    %1186 = vmatpush2.msra.mxu0 0.0
    %1187 = vmatprep.subr.mxu0 0.0
    %1188 = vmatpush2.msra.mxu0 0.0
    %1189 = vmatprep.subr.mxu0 0.0
    %1190 = vmatpush2.msra.mxu0 0.0
    %1191 = vmatprep.subr.mxu0 0.0
    %1192 = vmatpush2.msra.mxu0 0.0
    %1193 = vmatprep.subr.mxu0 0.0
    %1194 = vmatpush2.msra.mxu0 0.0
    %1195 = vmatprep.subr.mxu0 0.0
    %1196 = vmatpush2.msra.mxu0 0.0
    %1197 = vmatprep.subr.mxu0 0.0
    %1198 = vmatpush2.msra.mxu0 0.0
    %1199 = vmatprep.subr.mxu0 0.0
    %1200 = vmatpush2.msra.mxu0 0.0
    %1201 = vmatprep.subr.mxu0 0.0
    %1202 = vmatpush2.msra.mxu0 0.0
    %1203 = vmatprep.subr.mxu0 0.0
    %1204 = vmatpush2.msra.mxu0 0.0
    %1205 = vmatprep.subr.mxu0 0.0
    %1206 = vmatpush2.msra.mxu0 0.0
    %1207 = vmatprep.subr.mxu0 0.0
    %1208 = vmatpush2.msra.mxu0 0.0
    %1209 = vmatprep.subr.mxu0 0.0
    %1210 = vmatpush2.msra.mxu0 0.0
    %1211 = vmatprep.subr.mxu0 0.0
    %1212 = vmatpush2.msra.mxu0 0.0
    %1213 = vmatprep.subr.mxu0 0.0
    %1214 = vmatpush2.msra.mxu0 0.0
    %1215 = vmatprep.mubr.f32.mxu0 0.0
    %1216 = vmatmul.mubr.f32.gmra.mxu0 %v82
    %v1217 = vpop.f32.mrf.mxu0
    %v1218 = vadd.f32 0.0, %v1217
    %v1219 = vpop.f32.mrf.mxu0
    %1220 = vmatprep.mubr.f32.mxu0 0.0
    %1221 = vmatmul.mubr.f32.gmra.mxu0 %v85
    %v1222 = vpop.f32.mrf.mxu0
    %v1223 = vadd.f32 0.0, %v1222
    %v1224 = vpop.f32.mrf.mxu0
    %1225 = vdwg.mxu0
    %v1226 = vlaneseq
    %v1227 = vshrl.u32 %v1226, 7
    %v1228 = vsub.s32 0, %v1227
    %v1229 = vrot.slane %v1150, %v1228
    %1230 = vmatprep.subr.mxu0 0.0
    %1231 = vmatpush1.msra.mxu0 %v1149
    %1232 = vmatprep.subr.mxu0 0.0
    %1233 = vmatpush1.msra.mxu0 %v1148
    %1234 = vmatprep.subr.mxu0 0.0
    %1235 = vmatpush1.msra.mxu0 %v1147
    %1236 = vmatprep.subr.mxu0 0.0
    %1237 = vmatpush1.msra.mxu0 %v1146
    %1238 = vmatprep.subr.mxu0 0.0
    %1239 = vmatpush1.msra.mxu0 %v1145
    %1240 = vmatprep.subr.mxu0 0.0
    %1241 = vmatpush1.msra.mxu0 %v1144
    %1242 = vmatprep.subr.mxu0 0.0
    %1243 = vmatpush1.msra.mxu0 %v1143
    %1244 = vmatprep.subr.mxu0 0.0
    %1245 = vmatpush1.msra.mxu0 %v1142
    %1246 = vmatprep.subr.mxu0 0.0
    %1247 = vmatpush1.msra.mxu0 %v1141
    %1248 = vmatprep.subr.mxu0 0.0
    %1249 = vmatpush1.msra.mxu0 %v1140
    %1250 = vmatprep.subr.mxu0 0.0
    %1251 = vmatpush1.msra.mxu0 %v1139
    %1252 = vmatprep.subr.mxu0 0.0
    %1253 = vmatpush1.msra.mxu0 %v1138
    %1254 = vmatprep.subr.mxu0 0.0
    %1255 = vmatpush1.msra.mxu0 %v1137
    %1256 = vmatprep.subr.mxu0 0.0
    %1257 = vmatpush1.msra.mxu0 %v1136
    %1258 = vmatprep.subr.mxu0 0.0
    %1259 = vmatpush1.msra.mxu0 %v1135
    %1260 = vmatprep.subr.mxu0 0.0
    %1261 = vmatpush1.msra.mxu0 %v1134
    %1262 = vmatprep.subr.mxu0 0.0
    %1263 = vmatpush2.msra.mxu0 0.0
    %1264 = vmatprep.subr.mxu0 0.0
    %1265 = vmatpush2.msra.mxu0 0.0
    %1266 = vmatprep.subr.mxu0 0.0
    %1267 = vmatpush2.msra.mxu0 0.0
    %1268 = vmatprep.subr.mxu0 0.0
    %1269 = vmatpush2.msra.mxu0 0.0
    %1270 = vmatprep.subr.mxu0 0.0
    %1271 = vmatpush2.msra.mxu0 0.0
    %1272 = vmatprep.subr.mxu0 0.0
    %1273 = vmatpush2.msra.mxu0 0.0
    %1274 = vmatprep.subr.mxu0 0.0
    %1275 = vmatpush2.msra.mxu0 0.0
    %1276 = vmatprep.subr.mxu0 0.0
    %1277 = vmatpush2.msra.mxu0 0.0
    %1278 = vmatprep.subr.mxu0 0.0
    %1279 = vmatpush2.msra.mxu0 0.0
    %1280 = vmatprep.subr.mxu0 0.0
    %1281 = vmatpush2.msra.mxu0 0.0
    %1282 = vmatprep.subr.mxu0 0.0
    %1283 = vmatpush2.msra.mxu0 0.0
    %1284 = vmatprep.subr.mxu0 0.0
    %1285 = vmatpush2.msra.mxu0 0.0
    %1286 = vmatprep.subr.mxu0 0.0
    %1287 = vmatpush2.msra.mxu0 0.0
    %1288 = vmatprep.subr.mxu0 0.0
    %1289 = vmatpush2.msra.mxu0 0.0
    %1290 = vmatprep.subr.mxu0 0.0
    %1291 = vmatpush2.msra.mxu0 0.0
    %1292 = vmatprep.subr.mxu0 0.0
    %1293 = vmatpush2.msra.mxu0 0.0
    %1294 = vmatprep.mubr.f32.mxu0 0.0
    %1295 = vmatmul.mubr.f32.gmra.mxu0 %v1218
    %v1296 = vpop.f32.mrf.mxu0
    %v1297 = vadd.f32 %v1229, %v1296
    %v1298 = vpop.f32.mrf.mxu0
    %1299 = vmatprep.mubr.f32.mxu0 0.0
    %1300 = vmatmul.mubr.f32.gmra.mxu0 %v1223
    %v1301 = vpop.f32.mrf.mxu0
    %v1302 = vadd.f32 %v1229, %v1301
    %v1303 = vpop.f32.mrf.mxu0
    %1304 = vdwg.mxu0
    %vm1305 = vcmp.gt.f32.partialorder %v1297, 0.0
    %vm1306 = vcmp.gt.f32.partialorder %v1302, 0.0
    %v1307 = vmul.f32 %v1297, 0.01
    %v1308 = vmul.f32 %v1302, 0.01
    %v1309 = vsel %vm1305, %v1297, %v1307
    %v1310 = vsel %vm1306, %v1302, %v1308
    %s1311 = scalar_lea.vmem [#allocation7], 952
    %v1312 = vld [vmem:[%s1311] sm:$0xff]
    %v1313 = vld [vmem:[%s1311 + $0x8] sm:$0xff]
    %v1314 = vld [vmem:[%s1311 + $0x10] sm:$0xff]
    %v1315 = vld [vmem:[%s1311 + $0x18] sm:$0xff]
    %v1316 = vld [vmem:[%s1311 + $0x20] sm:$0xff]
    %v1317 = vld [vmem:[%s1311 + $0x28] sm:$0xff]
    %v1318 = vld [vmem:[%s1311 + $0x30] sm:$0xff]
    %v1319 = vld [vmem:[%s1311 + $0x38] sm:$0xff]
    %v1320 = vld [vmem:[%s1311 + $0x40] sm:$0xff]
    %v1321 = vld [vmem:[%s1311 + $0x48] sm:$0xff]
    %v1322 = vld [vmem:[%s1311 + $0x50] sm:$0xff]
    %v1323 = vld [vmem:[%s1311 + $0x58] sm:$0xff]
    %v1324 = vld [vmem:[%s1311 + $0x60] sm:$0xff]
    %v1325 = vld [vmem:[%s1311 + $0x68] sm:$0xff]
    %v1326 = vld [vmem:[%s1311 + $0x70] sm:$0xff]
    %v1327 = vld [vmem:[%s1311 + $0x78] sm:$0xff]
    %v1328 = vld [vmem:[%s1311 + $0x80] sm:$0x1]
    %1329 = vmatprep.subr.mxu0 0.0
    %1330 = vmatpush1.msra.mxu0 %v1327
    %1331 = vmatprep.subr.mxu0 0.0
    %1332 = vmatpush1.msra.mxu0 %v1326
    %1333 = vmatprep.subr.mxu0 0.0
    %1334 = vmatpush1.msra.mxu0 %v1325
    %1335 = vmatprep.subr.mxu0 0.0
    %1336 = vmatpush1.msra.mxu0 %v1324
    %1337 = vmatprep.subr.mxu0 0.0
    %1338 = vmatpush1.msra.mxu0 %v1323
    %1339 = vmatprep.subr.mxu0 0.0
    %1340 = vmatpush1.msra.mxu0 %v1322
    %1341 = vmatprep.subr.mxu0 0.0
    %1342 = vmatpush1.msra.mxu0 %v1321
    %1343 = vmatprep.subr.mxu0 0.0
    %1344 = vmatpush1.msra.mxu0 %v1320
    %1345 = vmatprep.subr.mxu0 0.0
    %1346 = vmatpush1.msra.mxu0 %v1319
    %1347 = vmatprep.subr.mxu0 0.0
    %1348 = vmatpush1.msra.mxu0 %v1318
    %1349 = vmatprep.subr.mxu0 0.0
    %1350 = vmatpush1.msra.mxu0 %v1317
    %1351 = vmatprep.subr.mxu0 0.0
    %1352 = vmatpush1.msra.mxu0 %v1316
    %1353 = vmatprep.subr.mxu0 0.0
    %1354 = vmatpush1.msra.mxu0 %v1315
    %1355 = vmatprep.subr.mxu0 0.0
    %1356 = vmatpush1.msra.mxu0 %v1314
    %1357 = vmatprep.subr.mxu0 0.0
    %1358 = vmatpush1.msra.mxu0 %v1313
    %1359 = vmatprep.subr.mxu0 0.0
    %1360 = vmatpush1.msra.mxu0 %v1312
    %1361 = vmatprep.subr.mxu0 0.0
    %1362 = vmatpush2.msra.mxu0 0.0
    %1363 = vmatprep.subr.mxu0 0.0
    %1364 = vmatpush2.msra.mxu0 0.0
    %1365 = vmatprep.subr.mxu0 0.0
    %1366 = vmatpush2.msra.mxu0 0.0
    %1367 = vmatprep.subr.mxu0 0.0
    %1368 = vmatpush2.msra.mxu0 0.0
    %1369 = vmatprep.subr.mxu0 0.0
    %1370 = vmatpush2.msra.mxu0 0.0
    %1371 = vmatprep.subr.mxu0 0.0
    %1372 = vmatpush2.msra.mxu0 0.0
    %1373 = vmatprep.subr.mxu0 0.0
    %1374 = vmatpush2.msra.mxu0 0.0
    %1375 = vmatprep.subr.mxu0 0.0
    %1376 = vmatpush2.msra.mxu0 0.0
    %1377 = vmatprep.subr.mxu0 0.0
    %1378 = vmatpush2.msra.mxu0 0.0
    %1379 = vmatprep.subr.mxu0 0.0
    %1380 = vmatpush2.msra.mxu0 0.0
    %1381 = vmatprep.subr.mxu0 0.0
    %1382 = vmatpush2.msra.mxu0 0.0
    %1383 = vmatprep.subr.mxu0 0.0
    %1384 = vmatpush2.msra.mxu0 0.0
    %1385 = vmatprep.subr.mxu0 0.0
    %1386 = vmatpush2.msra.mxu0 0.0
    %1387 = vmatprep.subr.mxu0 0.0
    %1388 = vmatpush2.msra.mxu0 0.0
    %1389 = vmatprep.subr.mxu0 0.0
    %1390 = vmatpush2.msra.mxu0 0.0
    %1391 = vmatprep.subr.mxu0 0.0
    %1392 = vmatpush2.msra.mxu0 0.0
    %1393 = vmatprep.mubr.f32.mxu0 0.0
    %1394 = vmatmul.mubr.f32.gmra.mxu0 %v1309
    %v1395 = vpop.f32.mrf.mxu0
    %v1396 = vadd.f32 0.0, %v1395
    %v1397 = vpop.f32.mrf.mxu0
    %1398 = vmatprep.mubr.f32.mxu0 0.0
    %1399 = vmatmul.mubr.f32.gmra.mxu0 %v1310
    %v1400 = vpop.f32.mrf.mxu0
    %v1401 = vadd.f32 0.0, %v1400
    %v1402 = vpop.f32.mrf.mxu0
    %1403 = vdwg.mxu0
    %v1404 = vlaneseq
    %v1405 = vshrl.u32 %v1404, 7
    %v1406 = vsub.s32 0, %v1405
    %v1407 = vrot.slane %v1328, %v1406
    %1408 = vmatprep.subr.mxu0 0.0
    %1409 = vmatpush1.msra.mxu0 0.0
    %1410 = vmatprep.subr.mxu0 0.0
    %1411 = vmatpush1.msra.mxu0 0.0
    %1412 = vmatprep.subr.mxu0 0.0
    %1413 = vmatpush1.msra.mxu0 0.0
    %1414 = vmatprep.subr.mxu0 0.0
    %1415 = vmatpush1.msra.mxu0 0.0
    %1416 = vmatprep.subr.mxu0 0.0
    %1417 = vmatpush1.msra.mxu0 0.0
    %1418 = vmatprep.subr.mxu0 0.0
    %1419 = vmatpush1.msra.mxu0 0.0
    %1420 = vmatprep.subr.mxu0 0.0
    %1421 = vmatpush1.msra.mxu0 0.0
    %1422 = vmatprep.subr.mxu0 0.0
    %1423 = vmatpush1.msra.mxu0 0.0
    %1424 = vmatprep.subr.mxu0 0.0
    %1425 = vmatpush1.msra.mxu0 0.0
    %1426 = vmatprep.subr.mxu0 0.0
    %1427 = vmatpush1.msra.mxu0 0.0
    %1428 = vmatprep.subr.mxu0 0.0
    %1429 = vmatpush1.msra.mxu0 0.0
    %1430 = vmatprep.subr.mxu0 0.0
    %1431 = vmatpush1.msra.mxu0 0.0
    %1432 = vmatprep.subr.mxu0 0.0
    %1433 = vmatpush1.msra.mxu0 0.0
    %1434 = vmatprep.subr.mxu0 0.0
    %1435 = vmatpush1.msra.mxu0 0.0
    %1436 = vmatprep.subr.mxu0 0.0
    %1437 = vmatpush1.msra.mxu0 %v1401
    %1438 = vmatprep.subr.mxu0 0.0
    %1439 = vmatpush1.msra.mxu0 %v1396
    %1440 = vmatprep.subr.mxu0 0.0
    %1441 = vmatpush2.msra.mxu0 0.0
    %1442 = vmatprep.subr.mxu0 0.0
    %1443 = vmatpush2.msra.mxu0 0.0
    %1444 = vmatprep.subr.mxu0 0.0
    %1445 = vmatpush2.msra.mxu0 0.0
    %1446 = vmatprep.subr.mxu0 0.0
    %1447 = vmatpush2.msra.mxu0 0.0
    %1448 = vmatprep.subr.mxu0 0.0
    %1449 = vmatpush2.msra.mxu0 0.0
    %1450 = vmatprep.subr.mxu0 0.0
    %1451 = vmatpush2.msra.mxu0 0.0
    %1452 = vmatprep.subr.mxu0 0.0
    %1453 = vmatpush2.msra.mxu0 0.0
    %1454 = vmatprep.subr.mxu0 0.0
    %1455 = vmatpush2.msra.mxu0 0.0
    %1456 = vmatprep.subr.mxu0 0.0
    %1457 = vmatpush2.msra.mxu0 0.0
    %1458 = vmatprep.subr.mxu0 0.0
    %1459 = vmatpush2.msra.mxu0 0.0
    %1460 = vmatprep.subr.mxu0 0.0
    %1461 = vmatpush2.msra.mxu0 0.0
    %1462 = vmatprep.subr.mxu0 0.0
    %1463 = vmatpush2.msra.mxu0 0.0
    %1464 = vmatprep.subr.mxu0 0.0
    %1465 = vmatpush2.msra.mxu0 0.0
    %1466 = vmatprep.subr.mxu0 0.0
    %1467 = vmatpush2.msra.mxu0 0.0
    %1468 = vmatprep.subr.mxu0 0.0
    %1469 = vmatpush2.msra.mxu0 0.0
    %1470 = vmatprep.subr.mxu0 0.0
    %1471 = vmatpush2.msra.mxu0 0.0
    %1472 = vmatprep.mubr.f32.mxu0 0.0
    %1473 = vmatmul.mubr.f32.gmra.mxu0 %v82
    %v1474 = vpop.f32.mrf.mxu0
    %v1475 = vadd.f32 %v1407, %v1474
    %v1476 = vpop.f32.mrf.mxu0
    %1477 = vmatprep.mubr.f32.mxu0 0.0
    %1478 = vmatmul.mubr.f32.gmra.mxu0 %v85
    %v1479 = vpop.f32.mrf.mxu0
    %v1480 = vadd.f32 %v1407, %v1479
    %v1481 = vpop.f32.mrf.mxu0
    %1482 = vdwg.mxu0
    %1483 = vst [vmem:[#allocation9] sm:$0xff] %v1475
    %1484 = vst [vmem:[#allocation9 + $0x8] sm:$0xff] %v1480
    // Predicated region
    $region26: #{tpu_custom_call.1} parent=1 // pred_check
      _
    $region27: #{tpu_custom_call.1} parent=1 // pred_check_branch
      %1486 = sbr.rel (0) target = $region29
    $region28: #{tpu_custom_call.1} parent=1 // pred_region
      %s1488 = ssub.s32 256, 256
      %1489 = vsyncadd [#allocation4], %s1488
      %s1490 = sshll.u32 [#allocation8], 4
      %s1491 = int_to_ptr.vmem [resolvable:$true] %s1490
      %1496 = dma.vmem_to_hbm [thread:$0]  %s1491, 256, %s3, [#allocation4], 128, 128, 8
    $region29: #{tpu_custom_call.1} parent=1 // pred_fallthru
      _
    // Predicated region
    $region30: #{tpu_custom_call.1} parent=1 // pred_check
      _
    $region31: #{tpu_custom_call.1} parent=1 // pred_check_branch
      %1498 = sbr.rel (0) target = $region33
    $region32: #{tpu_custom_call.1} parent=1 // pred_region
      %s1500 = ssub.s32 256, 256
      %1501 = vsyncadd [#allocation10], %s1500
      %s1502 = sshll.u32 [#allocation9], 4
      %s1503 = int_to_ptr.vmem [resolvable:$true] %s1502
      %1508 = dma.vmem_to_hbm [thread:$0]  %s1503, 256, %s4, [#allocation10], 128, 128, 8
    $region33: #{tpu_custom_call.1} parent=1 // pred_fallthru
      _
    // Predicated region
    $region34: #{tpu_custom_call.1} parent=1 // pred_check
      _
    $region35: #{tpu_custom_call.1} parent=1 // pred_check_branch
      %1510 = sbr.rel (0) target = $region37
    $region36: #{tpu_custom_call.1} parent=1 // pred_region
      %1511 = dma.done [#allocation4], 256
    $region37: #{tpu_custom_call.1} parent=1 // pred_fallthru
      _
    // Predicated region
    $region38: #{tpu_custom_call.1} parent=1 // pred_check
      _
    $region39: #{tpu_custom_call.1} parent=1 // pred_check_branch
      %1513 = sbr.rel (0) target = $region41
    $region40: #{tpu_custom_call.1} parent=1 // pred_region
      %1514 = dma.done [#allocation10], 256
    $region41: #{tpu_custom_call.1} parent=1 // pred_fallthru
      _
    %1515 = vsyncpa [#allocation3], 1
    %1516 = vsyncpa [#allocation6], 1
    %1517 = vsyncpa [#allocation4], 1
    %1518 = vsyncpa [#allocation10], 1

</llo_original>
